<compile_context>
chip_gen: v6e
topology: v6e:2x2x1
jax: 0.10.0
libtpu: 0.0.40
codegen_flags: <defaults>
</compile_context>

<pallas_src>
import functools

import jax
import jax.numpy as jnp
import numpy as np
from jax.experimental import pallas as pl
from jax.experimental.pallas import tpu as pltpu

BN_EPS = 1e-5
_LANE = 128
_SUBLANE = 8


def _rup(x, m):
    return (x + m - 1) // m * m


def _pick_band(ho, target):
    """Largest band height <= target that divides Ho (avoids ragged bands)."""
    th = max(1, min(target, ho))
    while ho % th:
        th -= 1
    return th


# -----------------------------------------------------------------------------
# Fused kernel: one (batch, H-band) tile per grid step.
# -----------------------------------------------------------------------------
def _inverted_residual_kernel(x_ref, *rest, stride, TH, TH_in, Wo, Wo_q,
                              has_expand, use_shortcut):
    if has_expand:
        w_exp_ref, w_dw_ref, b_dw_ref, w_proj_ref, b_proj_ref, o_ref = rest
    else:
        w_dw_ref, b_dw_ref, w_proj_ref, b_proj_ref, o_ref = rest

    hb = pl.program_id(1)
    row0 = pl.multiple_of(hb * (TH * stride), TH * stride)

    # Input band (with 3x3 halo rows); spatially zero-padded and channel-padded.
    xb = x_ref[pl.ds(row0, TH_in), :, :]           # (TH_in, Wq, Cin_p)
    _, wq, cin_p = xb.shape

    # ---- expand 1x1 conv (+ folded BN scale) + ReLU6 -------------------------
    # The expand bias rides along as an extra input channel that is 1.0 only at
    # valid spatial positions, so the halo stays exactly 0 after ReLU6 (i.e. the
    # zero-padding of the *expanded* map is preserved for the depthwise conv).
    if has_expand:
        chid_p = w_exp_ref.shape[1]
        y = jnp.dot(xb.reshape(TH_in * wq, cin_p), w_exp_ref[...],
                    preferred_element_type=jnp.float32)
        h = jnp.clip(y, 0.0, 6.0).reshape(TH_in, wq, chid_p)
    else:
        chid_p = cin_p
        h = xb.astype(jnp.float32)

    # ---- depthwise 3x3 conv (+ folded BN scale) + bias + ReLU6 ---------------
    # Hoist the stride decimation of W (sublane axis) out of the tap loop: build
    # `stride` column planes once; every tap is then a unit-stride slice along W
    # (row decimation happens on the cheap major axis).
    planes = [h[:, s::stride, :] for s in range(stride)]
    w_dw = w_dw_ref[...]                           # (3, 3, Chid_p), scale folded
    row_span = (TH - 1) * stride + 1
    acc = jnp.zeros((TH, Wo_q, chid_p), jnp.float32)
    for dy in range(3):
        for dx in range(3):
            p = planes[dx % stride]
            c0 = dx // stride
            patch = p[dy:dy + row_span:stride, c0:c0 + Wo_q, :]
            acc = acc + patch * w_dw[dy, dx, :]
    d = jnp.clip(acc + b_dw_ref[...], 0.0, 6.0)

    # ---- project 1x1 conv (+ folded BN scale) + bias (+ residual) ------------
    cout_p = w_proj_ref.shape[1]
    out = jnp.dot(d.reshape(TH * Wo_q, chid_p).astype(w_proj_ref.dtype),
                  w_proj_ref[...], preferred_element_type=jnp.float32)
    out = (out + b_proj_ref[...]).reshape(TH, Wo_q, cout_p)[:, :Wo, :]
    if use_shortcut:
        out = out + xb[1:TH + 1, 1:1 + Wo, :].astype(jnp.float32)
    o_ref[...] = out.astype(o_ref.dtype)


# -----------------------------------------------------------------------------
# Wrapper: NCHW in / NCHW out (like the PyTorch module).
# -----------------------------------------------------------------------------
def inverted_residual_forward(x_nchw, params, *, stride, expand_ratio,
                              use_shortcut, band_rows=8,
                              compute_dtype=jnp.float32):
    N, Cin, H, W = x_nchw.shape
    Chid = params["w_dw"].shape[2]
    Cout = params["w_proj"].shape[1]
    has_expand = expand_ratio != 1

    Ho = (H + 2 - 3) // stride + 1
    Wo = (W + 2 - 3) // stride + 1
    TH = _pick_band(Ho, band_rows)                 # output rows per band
    nbands = Ho // TH
    TH_in = (TH - 1) * stride + 3                  # input rows per band (w/ halo)

    # Lane-dense channel padding (multiples of 128); widths padded to multiples
    # of 8 so the in-kernel (rows*W, C) flattens are layout-preserving.
    Cin_p = _rup(Cin + 1, _LANE) if has_expand else _rup(Cin, _LANE)
    Chid_p = _rup(Chid, _LANE)
    Cout_p = _rup(Cout, _LANE)
    Wo_q = _rup(Wo, _SUBLANE)
    Wq = _rup(max(W + 2, (Wo_q - 1) * stride + 3), _SUBLANE)
    Hp = H + 2

    # Pad the (small, un-expanded) input once: 1-px halo + right/channel zeros.
    x = jnp.transpose(x_nchw, (0, 2, 3, 1)).astype(compute_dtype)   # NHWC
    xp = jnp.pad(x, ((0, 0), (1, 1), (1, Wq - W - 1), (0, Cin_p - Cin)))

    # Fold BN scale into the conv weights; biases stay separate (f32 epilogue).
    w_dw = jnp.pad((params["w_dw"] * params["s_dw"]).astype(compute_dtype),
                   ((0, 0), (0, 0), (0, Chid_p - Chid)))
    b_dw = jnp.pad(params["b_dw"], (0, Chid_p - Chid)
                   ).reshape(1, 1, Chid_p).astype(jnp.float32)
    w_proj = jnp.pad((params["w_proj"] * params["s_proj"][None, :]
                      ).astype(compute_dtype),
                     ((0, Chid_p - Chid), (0, Cout_p - Cout)))
    b_proj = jnp.pad(params["b_proj"], (0, Cout_p - Cout)
                     ).reshape(1, Cout_p).astype(jnp.float32)

    w_exp = None
    if has_expand:
        # Extra "ones" channel carrying the expand bias (0 in the padding halo).
        rr = jnp.arange(Hp)[:, None]
        cc = jnp.arange(Wq)[None, :]
        valid = ((rr >= 1) & (rr <= H) & (cc >= 1) & (cc <= W))
        xp = xp.at[:, :, :, Cin].set(valid.astype(compute_dtype)[None])
        w_exp = jnp.concatenate(
            [params["w_exp"] * params["s_exp"][None, :],
             params["b_exp"][None, :]], axis=0)                  # (Cin+1, Chid)
        w_exp = jnp.pad(w_exp, ((0, Cin_p - (Cin + 1)), (0, Chid_p - Chid))
                        ).astype(compute_dtype)

    inputs = [xp]
    in_specs = [pl.BlockSpec((None, Hp, Wq, Cin_p), lambda n, hb: (n, 0, 0, 0))]
    if has_expand:
        inputs.append(w_exp)
        in_specs.append(pl.BlockSpec((Cin_p, Chid_p), lambda n, hb: (0, 0)))
    inputs += [w_dw, b_dw, w_proj, b_proj]
    in_specs += [
        pl.BlockSpec((3, 3, Chid_p), lambda n, hb: (0, 0, 0)),
        pl.BlockSpec((1, 1, Chid_p), lambda n, hb: (0, 0, 0)),
        pl.BlockSpec((Chid_p, Cout_p), lambda n, hb: (0, 0)),
        pl.BlockSpec((1, Cout_p), lambda n, hb: (0, 0)),
    ]

    kernel = functools.partial(
        _inverted_residual_kernel, stride=stride, TH=TH, TH_in=TH_in, Wo=Wo,
        Wo_q=Wo_q, has_expand=has_expand, use_shortcut=use_shortcut)

    flops = (2 * N * H * W * Cin * Chid * int(has_expand)
             + 2 * 9 * N * Ho * Wo * Chid
             + 2 * N * Ho * Wo * Chid * Cout)
    bytes_accessed = int(
        xp.size * xp.dtype.itemsize
        + N * Ho * Wo * Cout_p * 4
        + sum(int(a.size) * a.dtype.itemsize for a in inputs[1:]))

    out = pl.pallas_call(
        kernel,
        out_shape=jax.ShapeDtypeStruct((N, Ho, Wo, Cout_p), jnp.float32),
        grid=(N, nbands),
        in_specs=in_specs,
        out_specs=pl.BlockSpec((None, TH, Wo, Cout_p),
                               lambda n, hb: (n, hb, 0, 0)),
        compiler_params=pltpu.CompilerParams(
            dimension_semantics=("parallel", "parallel"),
            vmem_limit_bytes=32 * 1024 * 1024),
        cost_estimate=pl.CostEstimate(
            flops=flops, transcendentals=0, bytes_accessed=bytes_accessed),
    )(*inputs)

    return jnp.transpose(out[:, :, :, :Cout], (0, 3, 1, 2))     # -> NCHW


# -----------------------------------------------------------------------------
# Deterministic parameter construction + pure-JAX reference + test.
# -----------------------------------------------------------------------------
def _fold_bn(gamma, beta, mean, var):
    s = gamma / jnp.sqrt(var + BN_EPS)
    b = beta - mean * s
    return s, b


def make_params(key, in_c, out_c, expand_ratio):
    hid = in_c * expand_ratio
    ks = jax.random.split(key, 12)

    def bn(k0, k1, k2, k3, c):
        gamma = jax.random.uniform(k0, (c,), minval=0.5, maxval=1.5)
        beta = 0.1 * jax.random.normal(k1, (c,))
        mean = 0.1 * jax.random.normal(k2, (c,))
        var = jax.random.uniform(k3, (c,), minval=0.5, maxval=1.5)
        return _fold_bn(gamma, beta, mean, var)

    params = {}
    # expand 1x1 conv: torch weight (hid, in_c, 1, 1) -> (in_c, hid)
    params["w_exp"] = 0.1 * jax.random.normal(ks[0], (in_c, hid))
    params["s_exp"], params["b_exp"] = bn(ks[1], ks[2], ks[3], ks[4], hid)
    # depthwise 3x3: torch weight (hid, 1, 3, 3) -> (3, 3, hid)
    params["w_dw"] = 0.1 * jax.random.normal(ks[5], (3, 3, hid))
    params["s_dw"], params["b_dw"] = bn(ks[6], ks[7], ks[8], ks[9], hid)
    # project 1x1 conv: torch weight (out_c, hid, 1, 1) -> (hid, out_c)
    params["w_proj"] = 0.1 * jax.random.normal(ks[10], (hid, out_c))
    g = jax.random.split(ks[11], 4)
    params["s_proj"], params["b_proj"] = bn(g[0], g[1], g[2], g[3], out_c)
    return params


def ref_forward(x_nchw, params, *, stride, expand_ratio, use_shortcut):
    x = jnp.transpose(x_nchw, (0, 2, 3, 1))
    N, H, W, Cin = x.shape
    if expand_ratio != 1:
        h = jnp.einsum("nhwc,cd->nhwd", x, params["w_exp"])
        h = jnp.clip(h * params["s_exp"] + params["b_exp"], 0.0, 6.0)
    else:
        h = x
    hp = jnp.pad(h, ((0, 0), (1, 1), (1, 1), (0, 0)))
    Ho = (H + 2 - 3) // stride + 1
    Wo = (W + 2 - 3) // stride + 1
    acc = jnp.zeros((N, Ho, Wo, h.shape[-1]), jnp.float32)
    for dy in range(3):
        for dx in range(3):
            patch = hp[:, dy:dy + stride * (Ho - 1) + 1:stride,
                       dx:dx + stride * (Wo - 1) + 1:stride, :]
            acc = acc + patch * params["w_dw"][dy, dx, :]
    d = jnp.clip(acc * params["s_dw"] + params["b_dw"], 0.0, 6.0)
    p = jnp.einsum("nhwc,cd->nhwd", d, params["w_proj"])
    p = p * params["s_proj"] + params["b_proj"]
    out = p + x if use_shortcut else p
    return jnp.transpose(out, (0, 3, 1, 2))


if __name__ == "__main__":
    # InvertedResidual(in_channel=4, out_channel=4, stride=1, expand_ratio=6)
    in_c, out_c, stride, expand_ratio = 4, 4, 1, 6
    use_shortcut = (stride == 1) and (in_c == out_c)

    key = jax.random.PRNGKey(0)
    kx, kp = jax.random.split(key)
    x = jax.random.normal(kx, (2, in_c, 16, 16), dtype=jnp.float32)  # NCHW
    params = make_params(kp, in_c, out_c, expand_ratio)

    fwd = jax.jit(functools.partial(
        inverted_residual_forward, stride=stride, expand_ratio=expand_ratio,
        use_shortcut=use_shortcut))
    out = jax.block_until_ready(fwd(x, params))

    ref = ref_forward(x, params, stride=stride, expand_ratio=expand_ratio,
                      use_shortcut=use_shortcut)

    assert out.shape == (2, out_c, 16, 16), out.shape
    np.testing.assert_allclose(np.asarray(out), np.asarray(ref),
                               rtol=1e-2, atol=1e-2)
    print("KERNEL_OK")
</pallas_src>

<mosaic_0001>
module attributes {stable_mosaic.version = 11 : i64} {
  func.func @_inverted_residual_kernel(%arg0: i32, %arg1: i32, %arg2: memref<1x18x24x128xf32, #tpu.memory_space<vmem>>, %arg3: memref<128x128xf32, #tpu.memory_space<vmem>>, %arg4: memref<3x3x128xf32, #tpu.memory_space<vmem>>, %arg5: memref<1x1x128xf32, #tpu.memory_space<vmem>>, %arg6: memref<128x128xf32, #tpu.memory_space<vmem>>, %arg7: memref<1x128xf32, #tpu.memory_space<vmem>>, %arg8: memref<1x8x16x128xf32, #tpu.memory_space<vmem>>) attributes {dimension_semantics = [#tpu.dimension_semantics<parallel>, #tpu.dimension_semantics<parallel>], iteration_bounds = array<i64: 2, 2>, scalar_prefetch = 0 : i64, scratch_operands = 0 : i64, tpu.core_type = #tpu.core_type<tc>, window_params = [{transform_indices = @transform_0, window_bounds = array<i64: 1, 18, 24, 128>}, {pipeline_mode = #tpu.pipeline_mode<synchronous>, transform_indices = @transform_1, window_bounds = array<i64: 128, 128>}, {pipeline_mode = #tpu.pipeline_mode<synchronous>, transform_indices = @transform_2, window_bounds = array<i64: 3, 3, 128>}, {pipeline_mode = #tpu.pipeline_mode<synchronous>, transform_indices = @transform_3, window_bounds = array<i64: 1, 1, 128>}, {pipeline_mode = #tpu.pipeline_mode<synchronous>, transform_indices = @transform_4, window_bounds = array<i64: 128, 128>}, {pipeline_mode = #tpu.pipeline_mode<synchronous>, transform_indices = @transform_5, window_bounds = array<i64: 1, 128>}, {transform_indices = @transform_6, window_bounds = array<i64: 1, 8, 16, 128>}]} {
    %c8_i32 = arith.constant 8 : i32
    %0 = arith.muli %arg1, %c8_i32 : i32
    %1 = tpu.assume_multiple %0, 8 : i32
    %c0 = arith.constant 0 : index
    %2 = arith.index_cast %1 : i32 to index
    %c0_0 = arith.constant 0 : index
    %c0_1 = arith.constant 0 : index
    %3 = vector.load %arg2[%c0, %2, %c0_0, %c0_1] : memref<1x18x24x128xf32, #tpu.memory_space<vmem>>, vector<1x10x24x128xf32>
    %4 = vector.shape_cast %3 : vector<1x10x24x128xf32> to vector<10x24x128xf32>
    %5 = vector.shape_cast %4 : vector<10x24x128xf32> to vector<240x128xf32>
    %c0_2 = arith.constant 0 : index
    %c0_3 = arith.constant 0 : index
    %6 = vector.load %arg3[%c0_2, %c0_3] : memref<128x128xf32, #tpu.memory_space<vmem>>, vector<128x128xf32>
    %cst = arith.constant dense<0.000000e+00> : vector<240x128xf32>
    %7 = tpu.matmul %5, %6, %cst {dimension_numbers = #tpu.dot_dimension_numbers<[1], [0], [0], [1], [0, 0, 1, 1], [], []>} : vector<240x128xf32>, vector<128x128xf32>, vector<240x128xf32> -> vector<240x128xf32>
    %cst_4 = arith.constant 0.000000e+00 : f32
    %cst_5 = arith.constant 6.000000e+00 : f32
    %8 = vector.broadcast %cst_4 : f32 to vector<240x128xf32>
    %9 = arith.maximumf %8, %7 : vector<240x128xf32>
    %10 = vector.broadcast %cst_5 : f32 to vector<240x128xf32>
    %11 = arith.minimumf %10, %9 : vector<240x128xf32>
    %12 = vector.shape_cast %11 : vector<240x128xf32> to vector<10x24x128xf32>
    %c0_6 = arith.constant 0 : index
    %c0_7 = arith.constant 0 : index
    %c0_8 = arith.constant 0 : index
    %13 = vector.load %arg4[%c0_6, %c0_7, %c0_8] : memref<3x3x128xf32, #tpu.memory_space<vmem>>, vector<3x3x128xf32>
    %cst_9 = arith.constant 0.000000e+00 : f32
    %14 = vector.broadcast %cst_9 : f32 to vector<8x16x128xf32>
    %15 = vector.extract_strided_slice %12 {offsets = [0, 0, 0], sizes = [8, 16, 128], strides = [1, 1, 1]} : vector<10x24x128xf32> to vector<8x16x128xf32>
    %16 = vector.extract_strided_slice %13 {offsets = [0, 0, 0], sizes = [1, 1, 128], strides = [1, 1, 1]} : vector<3x3x128xf32> to vector<1x1x128xf32>
    %17 = vector.shape_cast %16 : vector<1x1x128xf32> to vector<128xf32>
    %18 = vector.shape_cast %17 : vector<128xf32> to vector<1x1x128xf32>
    %19 = vector.broadcast %18 : vector<1x1x128xf32> to vector<8x16x128xf32>
    %20 = arith.mulf %15, %19 : vector<8x16x128xf32>
    %21 = arith.addf %14, %20 : vector<8x16x128xf32>
    %22 = vector.extract_strided_slice %12 {offsets = [0, 1, 0], sizes = [8, 16, 128], strides = [1, 1, 1]} : vector<10x24x128xf32> to vector<8x16x128xf32>
    %23 = vector.extract_strided_slice %13 {offsets = [0, 1, 0], sizes = [1, 1, 128], strides = [1, 1, 1]} : vector<3x3x128xf32> to vector<1x1x128xf32>
    %24 = vector.shape_cast %23 : vector<1x1x128xf32> to vector<128xf32>
    %25 = vector.shape_cast %24 : vector<128xf32> to vector<1x1x128xf32>
    %26 = vector.broadcast %25 : vector<1x1x128xf32> to vector<8x16x128xf32>
    %27 = arith.mulf %22, %26 : vector<8x16x128xf32>
    %28 = arith.addf %21, %27 : vector<8x16x128xf32>
    %29 = vector.extract_strided_slice %12 {offsets = [0, 2, 0], sizes = [8, 16, 128], strides = [1, 1, 1]} : vector<10x24x128xf32> to vector<8x16x128xf32>
    %30 = vector.extract_strided_slice %13 {offsets = [0, 2, 0], sizes = [1, 1, 128], strides = [1, 1, 1]} : vector<3x3x128xf32> to vector<1x1x128xf32>
    %31 = vector.shape_cast %30 : vector<1x1x128xf32> to vector<128xf32>
    %32 = vector.shape_cast %31 : vector<128xf32> to vector<1x1x128xf32>
    %33 = vector.broadcast %32 : vector<1x1x128xf32> to vector<8x16x128xf32>
    %34 = arith.mulf %29, %33 : vector<8x16x128xf32>
    %35 = arith.addf %28, %34 : vector<8x16x128xf32>
    %36 = vector.extract_strided_slice %12 {offsets = [1, 0, 0], sizes = [8, 16, 128], strides = [1, 1, 1]} : vector<10x24x128xf32> to vector<8x16x128xf32>
    %37 = vector.extract_strided_slice %13 {offsets = [1, 0, 0], sizes = [1, 1, 128], strides = [1, 1, 1]} : vector<3x3x128xf32> to vector<1x1x128xf32>
    %38 = vector.shape_cast %37 : vector<1x1x128xf32> to vector<128xf32>
    %39 = vector.shape_cast %38 : vector<128xf32> to vector<1x1x128xf32>
    %40 = vector.broadcast %39 : vector<1x1x128xf32> to vector<8x16x128xf32>
    %41 = arith.mulf %36, %40 : vector<8x16x128xf32>
    %42 = arith.addf %35, %41 : vector<8x16x128xf32>
    %43 = vector.extract_strided_slice %12 {offsets = [1, 1, 0], sizes = [8, 16, 128], strides = [1, 1, 1]} : vector<10x24x128xf32> to vector<8x16x128xf32>
    %44 = vector.extract_strided_slice %13 {offsets = [1, 1, 0], sizes = [1, 1, 128], strides = [1, 1, 1]} : vector<3x3x128xf32> to vector<1x1x128xf32>
    %45 = vector.shape_cast %44 : vector<1x1x128xf32> to vector<128xf32>
    %46 = vector.shape_cast %45 : vector<128xf32> to vector<1x1x128xf32>
    %47 = vector.broadcast %46 : vector<1x1x128xf32> to vector<8x16x128xf32>
    %48 = arith.mulf %43, %47 : vector<8x16x128xf32>
    %49 = arith.addf %42, %48 : vector<8x16x128xf32>
    %50 = vector.extract_strided_slice %12 {offsets = [1, 2, 0], sizes = [8, 16, 128], strides = [1, 1, 1]} : vector<10x24x128xf32> to vector<8x16x128xf32>
    %51 = vector.extract_strided_slice %13 {offsets = [1, 2, 0], sizes = [1, 1, 128], strides = [1, 1, 1]} : vector<3x3x128xf32> to vector<1x1x128xf32>
    %52 = vector.shape_cast %51 : vector<1x1x128xf32> to vector<128xf32>
    %53 = vector.shape_cast %52 : vector<128xf32> to vector<1x1x128xf32>
    %54 = vector.broadcast %53 : vector<1x1x128xf32> to vector<8x16x128xf32>
    %55 = arith.mulf %50, %54 : vector<8x16x128xf32>
    %56 = arith.addf %49, %55 : vector<8x16x128xf32>
    %57 = vector.extract_strided_slice %12 {offsets = [2, 0, 0], sizes = [8, 16, 128], strides = [1, 1, 1]} : vector<10x24x128xf32> to vector<8x16x128xf32>
    %58 = vector.extract_strided_slice %13 {offsets = [2, 0, 0], sizes = [1, 1, 128], strides = [1, 1, 1]} : vector<3x3x128xf32> to vector<1x1x128xf32>
    %59 = vector.shape_cast %58 : vector<1x1x128xf32> to vector<128xf32>
    %60 = vector.shape_cast %59 : vector<128xf32> to vector<1x1x128xf32>
    %61 = vector.broadcast %60 : vector<1x1x128xf32> to vector<8x16x128xf32>
    %62 = arith.mulf %57, %61 : vector<8x16x128xf32>
    %63 = arith.addf %56, %62 : vector<8x16x128xf32>
    %64 = vector.extract_strided_slice %12 {offsets = [2, 1, 0], sizes = [8, 16, 128], strides = [1, 1, 1]} : vector<10x24x128xf32> to vector<8x16x128xf32>
    %65 = vector.extract_strided_slice %13 {offsets = [2, 1, 0], sizes = [1, 1, 128], strides = [1, 1, 1]} : vector<3x3x128xf32> to vector<1x1x128xf32>
    %66 = vector.shape_cast %65 : vector<1x1x128xf32> to vector<128xf32>
    %67 = vector.shape_cast %66 : vector<128xf32> to vector<1x1x128xf32>
    %68 = vector.broadcast %67 : vector<1x1x128xf32> to vector<8x16x128xf32>
    %69 = arith.mulf %64, %68 : vector<8x16x128xf32>
    %70 = arith.addf %63, %69 : vector<8x16x128xf32>
    %71 = vector.extract_strided_slice %12 {offsets = [2, 2, 0], sizes = [8, 16, 128], strides = [1, 1, 1]} : vector<10x24x128xf32> to vector<8x16x128xf32>
    %72 = vector.extract_strided_slice %13 {offsets = [2, 2, 0], sizes = [1, 1, 128], strides = [1, 1, 1]} : vector<3x3x128xf32> to vector<1x1x128xf32>
    %73 = vector.shape_cast %72 : vector<1x1x128xf32> to vector<128xf32>
    %74 = vector.shape_cast %73 : vector<128xf32> to vector<1x1x128xf32>
    %75 = vector.broadcast %74 : vector<1x1x128xf32> to vector<8x16x128xf32>
    %76 = arith.mulf %71, %75 : vector<8x16x128xf32>
    %77 = arith.addf %70, %76 : vector<8x16x128xf32>
    %c0_10 = arith.constant 0 : index
    %c0_11 = arith.constant 0 : index
    %c0_12 = arith.constant 0 : index
    %78 = vector.load %arg5[%c0_10, %c0_11, %c0_12] : memref<1x1x128xf32, #tpu.memory_space<vmem>>, vector<1x1x128xf32>
    %79 = vector.broadcast %78 : vector<1x1x128xf32> to vector<8x16x128xf32>
    %80 = arith.addf %77, %79 : vector<8x16x128xf32>
    %cst_13 = arith.constant 0.000000e+00 : f32
    %cst_14 = arith.constant 6.000000e+00 : f32
    %81 = vector.broadcast %cst_13 : f32 to vector<8x16x128xf32>
    %82 = arith.maximumf %81, %80 : vector<8x16x128xf32>
    %83 = vector.broadcast %cst_14 : f32 to vector<8x16x128xf32>
    %84 = arith.minimumf %83, %82 : vector<8x16x128xf32>
    %85 = vector.shape_cast %84 : vector<8x16x128xf32> to vector<128x128xf32>
    %c0_15 = arith.constant 0 : index
    %c0_16 = arith.constant 0 : index
    %86 = vector.load %arg6[%c0_15, %c0_16] : memref<128x128xf32, #tpu.memory_space<vmem>>, vector<128x128xf32>
    %cst_17 = arith.constant dense<0.000000e+00> : vector<128x128xf32>
    %87 = tpu.matmul %85, %86, %cst_17 {dimension_numbers = #tpu.dot_dimension_numbers<[1], [0], [0], [1], [0, 0, 1, 1], [], []>} : vector<128x128xf32>, vector<128x128xf32>, vector<128x128xf32> -> vector<128x128xf32>
    %c0_18 = arith.constant 0 : index
    %c0_19 = arith.constant 0 : index
    %88 = vector.load %arg7[%c0_18, %c0_19] : memref<1x128xf32, #tpu.memory_space<vmem>>, vector<1x128xf32>
    %89 = vector.broadcast %88 : vector<1x128xf32> to vector<128x128xf32>
    %90 = arith.addf %87, %89 : vector<128x128xf32>
    %91 = vector.shape_cast %90 : vector<128x128xf32> to vector<8x16x128xf32>
    %92 = vector.extract_strided_slice %4 {offsets = [1, 1, 0], sizes = [8, 16, 128], strides = [1, 1, 1]} : vector<10x24x128xf32> to vector<8x16x128xf32>
    %93 = arith.addf %91, %92 : vector<8x16x128xf32>
    %c0_20 = arith.constant 0 : index
    %c0_21 = arith.constant 0 : index
    %c0_22 = arith.constant 0 : index
    %c0_23 = arith.constant 0 : index
    %94 = vector.load %arg8[%c0_20, %c0_21, %c0_22, %c0_23] : memref<1x8x16x128xf32, #tpu.memory_space<vmem>>, vector<1x8x16x128xf32>
    %95 = vector.shape_cast %94 : vector<1x8x16x128xf32> to vector<8x16x128xf32>
    %96 = vector.shape_cast %93 : vector<8x16x128xf32> to vector<1x8x16x128xf32>
    tpu.vector_store %arg8[%c0_20, %c0_21, %c0_22, %c0_23], %96 {strides = array<i32>} : memref<1x8x16x128xf32, #tpu.memory_space<vmem>>, vector<1x8x16x128xf32>,
    return
  }
  func.func @transform_0(%arg0: i32, %arg1: i32) -> (i32, i32, i32, i32) {
    %c0_i32 = arith.constant 0 : i32
    %c0_i32_0 = arith.constant 0 : i32
    %c0_i32_1 = arith.constant 0 : i32
    %c0_i32_2 = arith.constant 0 : i32
    return %arg0, %c0_i32, %c0_i32_0, %c0_i32_1 : i32, i32, i32, i32
  }
  func.func @transform_1(%arg0: i32, %arg1: i32) -> (i32, i32) {
    %c0_i32 = arith.constant 0 : i32
    %c0_i32_0 = arith.constant 0 : i32
    %c0_i32_1 = arith.constant 0 : i32
    return %c0_i32, %c0_i32_0 : i32, i32
  }
  func.func @transform_2(%arg0: i32, %arg1: i32) -> (i32, i32, i32) {
    %c0_i32 = arith.constant 0 : i32
    %c0_i32_0 = arith.constant 0 : i32
    %c0_i32_1 = arith.constant 0 : i32
    %c0_i32_2 = arith.constant 0 : i32
    return %c0_i32, %c0_i32_0, %c0_i32_1 : i32, i32, i32
  }
  func.func @transform_3(%arg0: i32, %arg1: i32) -> (i32, i32, i32) {
    %c0_i32 = arith.constant 0 : i32
    %c0_i32_0 = arith.constant 0 : i32
    %c0_i32_1 = arith.constant 0 : i32
    %c0_i32_2 = arith.constant 0 : i32
    return %c0_i32, %c0_i32_0, %c0_i32_1 : i32, i32, i32
  }
  func.func @transform_4(%arg0: i32, %arg1: i32) -> (i32, i32) {
    %c0_i32 = arith.constant 0 : i32
    %c0_i32_0 = arith.constant 0 : i32
    %c0_i32_1 = arith.constant 0 : i32
    return %c0_i32, %c0_i32_0 : i32, i32
  }
  func.func @transform_5(%arg0: i32, %arg1: i32) -> (i32, i32) {
    %c0_i32 = arith.constant 0 : i32
    %c0_i32_0 = arith.constant 0 : i32
    %c0_i32_1 = arith.constant 0 : i32
    return %c0_i32, %c0_i32_0 : i32, i32
  }
  func.func @transform_6(%arg0: i32, %arg1: i32) -> (i32, i32, i32, i32) {
    %c0_i32 = arith.constant 0 : i32
    %c0_i32_0 = arith.constant 0 : i32
    %c0_i32_1 = arith.constant 0 : i32
    return %arg0, %arg1, %c0_i32, %c0_i32_0 : i32, i32, i32, i32
  }
}

</mosaic_0001>

<llo_original>
// kernel: inverted_residual_forward.1
$region0: #{inverted_residual_forward.1}
  #allocation0 [shape = 'u32[]', space=smem, size = 0x4, offset = 0x4, fixed_abs, tag = 'smem constant byte address 0x4 - core index']
  #allocation1 [shape = 'u32[144,128]{1,0:T(1,128)}', space=vmem, size = 0x12000, scoped, tag = 'internal scratch']
  %s0 = inlined_call_operand.vmem [shape: f32[2,18,24,128], index: 0, kind: input, shape index: {}]
  %s1 = inlined_call_operand.vmem [shape: f32[128,128], index: 1, kind: input, shape index: {}]
  %s2 = inlined_call_operand.vmem [shape: f32[3,3,128], index: 2, kind: input, shape index: {}]
  %s3 = inlined_call_operand.vmem [shape: f32[1,1,128], index: 3, kind: input, shape index: {}]
  %s4 = inlined_call_operand.vmem [shape: f32[128,128], index: 4, kind: input, shape index: {}]
  %s5 = inlined_call_operand.vmem [shape: f32[1,128], index: 5, kind: input, shape index: {}]
  %s6 = inlined_call_operand.vmem [shape: f32[2,16,16,128], index: 6, kind: output, shape index: {}]
  %s7 = sld [smem:[#allocation0]]
  $region57: #{inverted_residual_forward.1} parent=0
    _
  %s9 = ssub.s32 1, %s7
  %s10 = scalar_select 0, %s9, %s7
  loop: start=0, step=1, limit=6
  $region2: #{inverted_residual_forward.1} parent=0 // loop_pre_header
    _
  $region3: #{inverted_residual_forward.1} parent=0 // loop_header
    %s12 = sphi 0, %s16
    %p13 = scmp.ge.s32.totalorder %s12, 6
    %s19 = sphi 0, %s31
    %s20 = sphi 0, %s27
    %s21 = sphi 0, %s19
    %s22 = sphi 0, %s20
    %s23 = sphi 0, %s21
    %s24 = sphi 0, %s22
    %s34 = sphi 0, %s36
    %s37 = sphi 0, %s34
    %s38 = sphi 0, %s37
    %s54 = sphi 0, %s38
    %s58 = sphi 0, %s58
    %s60 = sphi 0, %s58
    %s61 = sphi 0, %s60
    %s75 = sphi 0, %s61
    %s79 = sphi 0, %s79
    %s81 = sphi 0, %s79
    %s82 = sphi 0, %s81
    %s96 = sphi 0, %s82
    %s100 = sphi 0, %s100
    %s102 = sphi 0, %s100
    %s103 = sphi 0, %s102
    %s117 = sphi 0, %s103
    %s121 = sphi 0, %s121
    %s123 = sphi 0, %s121
    %s124 = sphi 0, %s123
    %s138 = sphi 0, %s124
    %s142 = sphi 0, %s142
    %s144 = sphi 0, %s142
    %s145 = sphi 0, %s144
    %s159 = sphi 0, %s145
    %s167 = sphi 0, %s169
    %s170 = sphi 0, %s167
    %s171 = sphi 0, %s170
    %s187 = sphi 0, %s171
  $region4: #{inverted_residual_forward.1} parent=0 // loop_header_branch
    %15 = sbr.rel (%p13) target = $region8
  $region5: #{inverted_residual_forward.1} parent=0 // loop_body
    %s17 = ssub.s32 %s12, 1
    %s18 = ssub.s32 %s12, 2
    %s25 = sadd.s32 1, %s20
    %p26 = scmp.ge.s32.totalorder %s25, 2
    %s27 = scalar_select %p26, 0, %s25
    %s28 = sadd.s32 1, %s19
    %s29 = scalar_select %p26, %s28, %s19
    %p30 = scmp.ge.s32.totalorder %s29, 2
    %s31 = scalar_select %p30, 0, %s29
    %s32 = ssub.s32 %s19, %s31
    %p33 = scmp.eq.s32.totalorder %s32, 0
    %s35 = sadd.s32 %s34, 1
    %s36 = scalar_select %p33, %s34, %s35
    %p39 = pneg %p33
    %p40 = scmp.eq.s32.totalorder %s12, 3
    %p41 = por %p39, %p40
    %p42 = scmp.ne.s32.totalorder %s34, %s37
    %p43 = scmp.eq.s32.totalorder %s12, 0
    %p44 = por %p42, %p43
    %p45 = scmp.ne.s32.totalorder %s34, %s37
    %p46 = scmp.eq.s32.totalorder %s17, 3
    %p47 = por %p45, %p46
    %p48 = scmp.ne.s32.totalorder %s37, %s38
    %p49 = scmp.eq.s32.totalorder %s17, 0
    %p50 = por %p48, %p49
    %p51 = scmp.ne.s32.totalorder %s37, %s38
    %p52 = scmp.eq.s32.totalorder %s18, 3
    %p53 = por %p51, %p52
    %p55 = scmp.ne.s32.totalorder %s38, %s54
    %p56 = scmp.eq.s32.totalorder %s18, 0
    %p57 = por %p55, %p56
    %s59 = sadd.s32 %s58, 1
    %p62 = scmp.eq.s32.totalorder %s12, 3
    %p63 = scmp.ne.s32.totalorder %s58, %s60
    %p64 = scmp.eq.s32.totalorder %s12, 0
    %p65 = por %p63, %p64
    %p66 = scmp.ne.s32.totalorder %s58, %s60
    %p67 = scmp.eq.s32.totalorder %s17, 3
    %p68 = por %p66, %p67
    %p69 = scmp.ne.s32.totalorder %s60, %s61
    %p70 = scmp.eq.s32.totalorder %s17, 0
    %p71 = por %p69, %p70
    %p72 = scmp.ne.s32.totalorder %s60, %s61
    %p73 = scmp.eq.s32.totalorder %s18, 3
    %p74 = por %p72, %p73
    %p76 = scmp.ne.s32.totalorder %s61, %s75
    %p77 = scmp.eq.s32.totalorder %s18, 0
    %p78 = por %p76, %p77
    %s80 = sadd.s32 %s79, 1
    %p83 = scmp.eq.s32.totalorder %s12, 3
    %p84 = scmp.ne.s32.totalorder %s79, %s81
    %p85 = scmp.eq.s32.totalorder %s12, 0
    %p86 = por %p84, %p85
    %p87 = scmp.ne.s32.totalorder %s79, %s81
    %p88 = scmp.eq.s32.totalorder %s17, 3
    %p89 = por %p87, %p88
    %p90 = scmp.ne.s32.totalorder %s81, %s82
    %p91 = scmp.eq.s32.totalorder %s17, 0
    %p92 = por %p90, %p91
    %p93 = scmp.ne.s32.totalorder %s81, %s82
    %p94 = scmp.eq.s32.totalorder %s18, 3
    %p95 = por %p93, %p94
    %p97 = scmp.ne.s32.totalorder %s82, %s96
    %p98 = scmp.eq.s32.totalorder %s18, 0
    %p99 = por %p97, %p98
    %s101 = sadd.s32 %s100, 1
    %p104 = scmp.eq.s32.totalorder %s12, 3
    %p105 = scmp.ne.s32.totalorder %s100, %s102
    %p106 = scmp.eq.s32.totalorder %s12, 0
    %p107 = por %p105, %p106
    %p108 = scmp.ne.s32.totalorder %s100, %s102
    %p109 = scmp.eq.s32.totalorder %s17, 3
    %p110 = por %p108, %p109
    %p111 = scmp.ne.s32.totalorder %s102, %s103
    %p112 = scmp.eq.s32.totalorder %s17, 0
    %p113 = por %p111, %p112
    %p114 = scmp.ne.s32.totalorder %s102, %s103
    %p115 = scmp.eq.s32.totalorder %s18, 3
    %p116 = por %p114, %p115
    %p118 = scmp.ne.s32.totalorder %s103, %s117
    %p119 = scmp.eq.s32.totalorder %s18, 0
    %p120 = por %p118, %p119
    %s122 = sadd.s32 %s121, 1
    %p125 = scmp.eq.s32.totalorder %s12, 3
    %p126 = scmp.ne.s32.totalorder %s121, %s123
    %p127 = scmp.eq.s32.totalorder %s12, 0
    %p128 = por %p126, %p127
    %p129 = scmp.ne.s32.totalorder %s121, %s123
    %p130 = scmp.eq.s32.totalorder %s17, 3
    %p131 = por %p129, %p130
    %p132 = scmp.ne.s32.totalorder %s123, %s124
    %p133 = scmp.eq.s32.totalorder %s17, 0
    %p134 = por %p132, %p133
    %p135 = scmp.ne.s32.totalorder %s123, %s124
    %p136 = scmp.eq.s32.totalorder %s18, 3
    %p137 = por %p135, %p136
    %p139 = scmp.ne.s32.totalorder %s124, %s138
    %p140 = scmp.eq.s32.totalorder %s18, 0
    %p141 = por %p139, %p140
    %s143 = sadd.s32 %s142, 1
    %p146 = scmp.eq.s32.totalorder %s12, 3
    %p147 = scmp.ne.s32.totalorder %s142, %s144
    %p148 = scmp.eq.s32.totalorder %s12, 0
    %p149 = por %p147, %p148
    %p150 = scmp.ne.s32.totalorder %s142, %s144
    %p151 = scmp.eq.s32.totalorder %s17, 3
    %p152 = por %p150, %p151
    %p153 = scmp.ne.s32.totalorder %s144, %s145
    %p154 = scmp.eq.s32.totalorder %s17, 0
    %p155 = por %p153, %p154
    %p156 = scmp.ne.s32.totalorder %s144, %s145
    %p157 = scmp.eq.s32.totalorder %s18, 3
    %p158 = por %p156, %p157
    %p160 = scmp.ne.s32.totalorder %s145, %s159
    %p161 = scmp.eq.s32.totalorder %s18, 0
    %p162 = por %p160, %p161
    %s163 = ssub.s32 %s19, %s31
    %s164 = ssub.s32 %s20, %s27
    %s165 = sor.u32 %s163, %s164
    %p166 = scmp.eq.s32.totalorder %s165, 0
    %s168 = sadd.s32 %s167, 1
    %s169 = scalar_select %p166, %s167, %s168
    %p172 = pneg %p166
    %p173 = scmp.eq.s32.totalorder %s12, 3
    %p174 = por %p172, %p173
    %p175 = scmp.ne.s32.totalorder %s167, %s170
    %p176 = scmp.eq.s32.totalorder %s12, 0
    %p177 = por %p175, %p176
    %p178 = scmp.ne.s32.totalorder %s167, %s170
    %p179 = scmp.eq.s32.totalorder %s17, 3
    %p180 = por %p178, %p179
    %p181 = scmp.ne.s32.totalorder %s170, %s171
    %p182 = scmp.eq.s32.totalorder %s17, 0
    %p183 = por %p181, %p182
    %p184 = scmp.ne.s32.totalorder %s170, %s171
    %p185 = scmp.eq.s32.totalorder %s18, 3
    %p186 = por %p184, %p185
    %p188 = scmp.ne.s32.totalorder %s171, %s187
    %p189 = scmp.eq.s32.totalorder %s18, 0
    %p190 = por %p188, %p189
    %p191 = scmp.le.s32.totalorder 1, %s12
    %p192 = scmp.lt.s32.totalorder %s12, 5
    %p193 = pnand %p191, %p192
    %p194 = pneg %p193
    // Predicated region
    $region9: #{inverted_residual_forward.1} parent=5 // pred_check
      _
    $region10: #{inverted_residual_forward.1} parent=5 // pred_check_branch
      %196 = sbr.rel (%p193) target = $region12
    $region11: #{inverted_residual_forward.1} parent=5 // pred_region
      %s197 = ssub.s32 %s12, 1
      // Predicated region
      $region13: #{inverted_residual_forward.1} parent=11 // pred_check
        %p198 = pneg %p71
      $region14: #{inverted_residual_forward.1} parent=11 // pred_check_branch
        %200 = sbr.rel (%p198) target = $region16
      $region15: #{inverted_residual_forward.1} parent=11 // pred_region
        _
      $region16: #{inverted_residual_forward.1} parent=11 // pred_fallthru
        _
      // Predicated region
      $region17: #{inverted_residual_forward.1} parent=11 // pred_check
        %p201 = pneg %p92
      $region18: #{inverted_residual_forward.1} parent=11 // pred_check_branch
        %203 = sbr.rel (%p201) target = $region20
      $region19: #{inverted_residual_forward.1} parent=11 // pred_region
        _
      $region20: #{inverted_residual_forward.1} parent=11 // pred_fallthru
        _
      // Predicated region
      $region21: #{inverted_residual_forward.1} parent=11 // pred_check
        %p204 = pneg %p113
      $region22: #{inverted_residual_forward.1} parent=11 // pred_check_branch
        %206 = sbr.rel (%p204) target = $region24
      $region23: #{inverted_residual_forward.1} parent=11 // pred_region
        _
      $region24: #{inverted_residual_forward.1} parent=11 // pred_fallthru
        _
      // Predicated region
      $region25: #{inverted_residual_forward.1} parent=11 // pred_check
        %p207 = pneg %p134
      $region26: #{inverted_residual_forward.1} parent=11 // pred_check_branch
        %209 = sbr.rel (%p207) target = $region28
      $region27: #{inverted_residual_forward.1} parent=11 // pred_region
        _
      $region28: #{inverted_residual_forward.1} parent=11 // pred_fallthru
        _
      // Predicated region
      $region29: #{inverted_residual_forward.1} parent=11 // pred_check
        %p210 = pneg %p155
      $region30: #{inverted_residual_forward.1} parent=11 // pred_check_branch
        %212 = sbr.rel (%p210) target = $region32
      $region31: #{inverted_residual_forward.1} parent=11 // pred_region
        _
      $region32: #{inverted_residual_forward.1} parent=11 // pred_fallthru
        _
    $region12: #{inverted_residual_forward.1} parent=5 // pred_fallthru
      _
    %p213 = scmp.lt.s32.totalorder %s12, 4
    // Predicated region
    $region33: #{inverted_residual_forward.1} parent=5 // pred_check
      %p214 = pneg %p213
    $region34: #{inverted_residual_forward.1} parent=5 // pred_check_branch
      %216 = sbr.rel (%p214) target = $region36
    $region35: #{inverted_residual_forward.1} parent=5 // pred_region
      // Predicated region
      $region37: #{inverted_residual_forward.1} parent=35 // pred_check
        %p217 = pneg %p44
      $region38: #{inverted_residual_forward.1} parent=35 // pred_check_branch
        %219 = sbr.rel (%p217) target = $region40
      $region39: #{inverted_residual_forward.1} parent=35 // pred_region
        %p220 = scmp.lt.s32.totalorder %s19, 1
        %s221 = scalar_select %p220, %s19, 1
        %s222 = smul.addr %s221, 54
        %s223 = smul.addr %s222, 8
        %s224 = scalar_lea.vmem %s0, %s223
      $region40: #{inverted_residual_forward.1} parent=35 // pred_fallthru
        _
    $region36: #{inverted_residual_forward.1} parent=5 // pred_fallthru
      _
    %p225 = scmp.le.s32.totalorder 1, %s12
    %p226 = scmp.lt.s32.totalorder %s12, 5
    %p227 = pnand %p225, %p226
    %p228 = pneg %p227
    // Predicated region
    $region41: #{inverted_residual_forward.1} parent=5 // pred_check
      _
    $region42: #{inverted_residual_forward.1} parent=5 // pred_check_branch
      %230 = sbr.rel (%p227) target = $region44
    $region43: #{inverted_residual_forward.1} parent=5 // pred_region
      %s231 = ssub.s32 %s12, 1
      %p232 = scmp.lt.s32.totalorder %s21, 1
      %s233 = scalar_select %p232, %s21, 1
      %s234 = smul.addr %s233, 54
      %s235 = smul.addr %s234, 8
      %s236 = scalar_lea.vmem %s0, %s235
      %p237 = pneg %p50
      %p238 = pneg %p47
      %p239 = pneg %p71
      %p240 = pneg %p68
      %p241 = pneg %p92
      %p242 = pneg %p89
      %p243 = pneg %p113
      %p244 = pneg %p110
      %p245 = pneg %p134
      %p246 = pneg %p131
      %p247 = pneg %p155
      %p248 = pneg %p152
      %p249 = pneg %p183
      %p250 = pneg %p180
      %s251 = smul.u32 8, %s22
      %p252 = scmp.lt.s32.totalorder %s21, 1
      %s253 = scalar_select %p252, %s21, 1
      %p254 = scmp.lt.s32.totalorder %s251, 15
      %s255 = scalar_select %p254, %s251, 15
      %s256 = smul.addr %s255, 2
      %s257 = smul.addr %s253, 32
      %s258 = sadd.s32 %s256, %s257
      %s259 = smul.addr %s258, 8
      %s260 = scalar_lea.vmem %s6, %s259
      %p261 = scmp.lt.s32.totalorder %s21, 1
      %s262 = scalar_select %p261, %s21, 1
      %s263 = smul.addr %s262, 54
      %s264 = smul.addr %s263, 8
      %s265 = scalar_lea.vmem %s0, %s264
      %s266 = smul.u32 8, %s22
      %p267 = scmp.lt.s32.totalorder %s21, 1
      %s268 = scalar_select %p267, %s21, 1
      %p269 = scmp.lt.s32.totalorder %s266, 15
      %s270 = scalar_select %p269, %s266, 15
      %s271 = smul.addr %s270, 2
      %s272 = smul.addr %s268, 32
      %s273 = sadd.s32 %s271, %s272
      %s274 = smul.addr %s273, 8
      %s275 = scalar_lea.vmem %s6, %s274
      %s276 = smul.u32 8, %s22
      %s277 = smul.u32 %s22, 8
      %s278 = smul.u32 %s277, 24
      %s279 = scalar_lea.vmem %s265, %s278
      %v280 = vld [vmem:[%s279] sm:$0xff]
      %v281 = vld [vmem:[%s279 + $0x8] sm:$0xff]
      %v282 = vld [vmem:[%s279 + $0x10] sm:$0xff]
      %v283 = vld [vmem:[%s279 + $0x18] sm:$0xff]
      %v284 = vld [vmem:[%s279 + $0x20] sm:$0xff]
      %v285 = vld [vmem:[%s279 + $0x28] sm:$0xff]
      %v286 = vld [vmem:[%s279 + $0x30] sm:$0xff]
      %v287 = vld [vmem:[%s279 + $0x38] sm:$0xff]
      %v288 = vld [vmem:[%s279 + $0x40] sm:$0xff]
      %v289 = vld [vmem:[%s279 + $0x48] sm:$0xff]
      %v290 = vld [vmem:[%s279 + $0x50] sm:$0xff]
      %v291 = vld [vmem:[%s279 + $0x58] sm:$0xff]
      %v292 = vld [vmem:[%s279 + $0x60] sm:$0xff]
      %v293 = vld [vmem:[%s279 + $0x68] sm:$0xff]
      %v294 = vld [vmem:[%s279 + $0x70] sm:$0xff]
      %v295 = vld [vmem:[%s279 + $0x78] sm:$0xff]
      %v296 = vld [vmem:[%s279 + $0x80] sm:$0xff]
      %v297 = vld [vmem:[%s279 + $0x88] sm:$0xff]
      %v298 = vld [vmem:[%s279 + $0x90] sm:$0xff]
      %v299 = vld [vmem:[%s279 + $0x98] sm:$0xff]
      %v300 = vld [vmem:[%s279 + $0xa0] sm:$0xff]
      %v301 = vld [vmem:[%s279 + $0xa8] sm:$0xff]
      %v302 = vld [vmem:[%s279 + $0xb0] sm:$0xff]
      %v303 = vld [vmem:[%s279 + $0xb8] sm:$0xff]
      %v304 = vld [vmem:[%s279 + $0xc0] sm:$0xff]
      %v305 = vld [vmem:[%s279 + $0xc8] sm:$0xff]
      %v306 = vld [vmem:[%s279 + $0xd0] sm:$0xff]
      %v307 = vld [vmem:[%s279 + $0xd8] sm:$0xff]
      %v308 = vld [vmem:[%s279 + $0xe0] sm:$0xff]
      %v309 = vld [vmem:[%s279 + $0xe8] sm:$0xff]
      %v310 = vld [vmem:[%s1] sm:$0xff]
      %v311 = vld [vmem:[%s1 + $0x8] sm:$0xff]
      %v312 = vld [vmem:[%s1 + $0x10] sm:$0xff]
      %v313 = vld [vmem:[%s1 + $0x18] sm:$0xff]
      %v314 = vld [vmem:[%s1 + $0x20] sm:$0xff]
      %v315 = vld [vmem:[%s1 + $0x28] sm:$0xff]
      %v316 = vld [vmem:[%s1 + $0x30] sm:$0xff]
      %v317 = vld [vmem:[%s1 + $0x38] sm:$0xff]
      %v318 = vld [vmem:[%s1 + $0x40] sm:$0xff]
      %v319 = vld [vmem:[%s1 + $0x48] sm:$0xff]
      %v320 = vld [vmem:[%s1 + $0x50] sm:$0xff]
      %v321 = vld [vmem:[%s1 + $0x58] sm:$0xff]
      %v322 = vld [vmem:[%s1 + $0x60] sm:$0xff]
      %v323 = vld [vmem:[%s1 + $0x68] sm:$0xff]
      %v324 = vld [vmem:[%s1 + $0x70] sm:$0xff]
      %v325 = vld [vmem:[%s1 + $0x78] sm:$0xff]
      %326 = vmatprep.subr.mxu0 0.0
      %327 = vmatpush1.msra.mxu0 %v325
      %328 = vmatprep.subr.mxu0 0.0
      %329 = vmatpush1.msra.mxu0 %v324
      %330 = vmatprep.subr.mxu0 0.0
      %331 = vmatpush1.msra.mxu0 %v323
      %332 = vmatprep.subr.mxu0 0.0
      %333 = vmatpush1.msra.mxu0 %v322
      %334 = vmatprep.subr.mxu0 0.0
      %335 = vmatpush1.msra.mxu0 %v321
      %336 = vmatprep.subr.mxu0 0.0
      %337 = vmatpush1.msra.mxu0 %v320
      %338 = vmatprep.subr.mxu0 0.0
      %339 = vmatpush1.msra.mxu0 %v319
      %340 = vmatprep.subr.mxu0 0.0
      %341 = vmatpush1.msra.mxu0 %v318
      %342 = vmatprep.subr.mxu0 0.0
      %343 = vmatpush1.msra.mxu0 %v317
      %344 = vmatprep.subr.mxu0 0.0
      %345 = vmatpush1.msra.mxu0 %v316
      %346 = vmatprep.subr.mxu0 0.0
      %347 = vmatpush1.msra.mxu0 %v315
      %348 = vmatprep.subr.mxu0 0.0
      %349 = vmatpush1.msra.mxu0 %v314
      %350 = vmatprep.subr.mxu0 0.0
      %351 = vmatpush1.msra.mxu0 %v313
      %352 = vmatprep.subr.mxu0 0.0
      %353 = vmatpush1.msra.mxu0 %v312
      %354 = vmatprep.subr.mxu0 0.0
      %355 = vmatpush1.msra.mxu0 %v311
      %356 = vmatprep.subr.mxu0 0.0
      %357 = vmatpush1.msra.mxu0 %v310
      %358 = vmatprep.subr.mxu0 0.0
      %359 = vmatpush2.msra.mxu0 0.0
      %360 = vmatprep.subr.mxu0 0.0
      %361 = vmatpush2.msra.mxu0 0.0
      %362 = vmatprep.subr.mxu0 0.0
      %363 = vmatpush2.msra.mxu0 0.0
      %364 = vmatprep.subr.mxu0 0.0
      %365 = vmatpush2.msra.mxu0 0.0
      %366 = vmatprep.subr.mxu0 0.0
      %367 = vmatpush2.msra.mxu0 0.0
      %368 = vmatprep.subr.mxu0 0.0
      %369 = vmatpush2.msra.mxu0 0.0
      %370 = vmatprep.subr.mxu0 0.0
      %371 = vmatpush2.msra.mxu0 0.0
      %372 = vmatprep.subr.mxu0 0.0
      %373 = vmatpush2.msra.mxu0 0.0
      %374 = vmatprep.subr.mxu0 0.0
      %375 = vmatpush2.msra.mxu0 0.0
      %376 = vmatprep.subr.mxu0 0.0
      %377 = vmatpush2.msra.mxu0 0.0
      %378 = vmatprep.subr.mxu0 0.0
      %379 = vmatpush2.msra.mxu0 0.0
      %380 = vmatprep.subr.mxu0 0.0
      %381 = vmatpush2.msra.mxu0 0.0
      %382 = vmatprep.subr.mxu0 0.0
      %383 = vmatpush2.msra.mxu0 0.0
      %384 = vmatprep.subr.mxu0 0.0
      %385 = vmatpush2.msra.mxu0 0.0
      %386 = vmatprep.subr.mxu0 0.0
      %387 = vmatpush2.msra.mxu0 0.0
      %388 = vmatprep.subr.mxu0 0.0
      %389 = vmatpush2.msra.mxu0 0.0
      %390 = vmatprep.mubr.f32.mxu0 0.0
      %391 = vmatmul.mubr.f32.gmra.mxu0 %v280
      %v392 = vpop.f32.mrf.mxu0
      %v393 = vadd.f32 0.0, %v392
      %v394 = vpop.f32.mrf.mxu0
      %395 = vmatprep.mubr.f32.mxu0 0.0
      %396 = vmatmul.mubr.f32.gmra.mxu0 %v281
      %v397 = vpop.f32.mrf.mxu0
      %v398 = vadd.f32 0.0, %v397
      %v399 = vpop.f32.mrf.mxu0
      %400 = vmatprep.mubr.f32.mxu0 0.0
      %401 = vmatmul.mubr.f32.gmra.mxu0 %v282
      %v402 = vpop.f32.mrf.mxu0
      %v403 = vadd.f32 0.0, %v402
      %v404 = vpop.f32.mrf.mxu0
      %405 = vmatprep.mubr.f32.mxu0 0.0
      %406 = vmatmul.mubr.f32.gmra.mxu0 %v283
      %v407 = vpop.f32.mrf.mxu0
      %v408 = vadd.f32 0.0, %v407
      %v409 = vpop.f32.mrf.mxu0
      %410 = vmatprep.mubr.f32.mxu0 0.0
      %411 = vmatmul.mubr.f32.gmra.mxu0 %v284
      %v412 = vpop.f32.mrf.mxu0
      %v413 = vadd.f32 0.0, %v412
      %v414 = vpop.f32.mrf.mxu0
      %415 = vmatprep.mubr.f32.mxu0 0.0
      %416 = vmatmul.mubr.f32.gmra.mxu0 %v285
      %v417 = vpop.f32.mrf.mxu0
      %v418 = vadd.f32 0.0, %v417
      %v419 = vpop.f32.mrf.mxu0
      %420 = vmatprep.mubr.f32.mxu0 0.0
      %421 = vmatmul.mubr.f32.gmra.mxu0 %v286
      %v422 = vpop.f32.mrf.mxu0
      %v423 = vadd.f32 0.0, %v422
      %v424 = vpop.f32.mrf.mxu0
      %425 = vmatprep.mubr.f32.mxu0 0.0
      %426 = vmatmul.mubr.f32.gmra.mxu0 %v287
      %v427 = vpop.f32.mrf.mxu0
      %v428 = vadd.f32 0.0, %v427
      %v429 = vpop.f32.mrf.mxu0
      %430 = vmatprep.mubr.f32.mxu0 0.0
      %431 = vmatmul.mubr.f32.gmra.mxu0 %v288
      %v432 = vpop.f32.mrf.mxu0
      %v433 = vadd.f32 0.0, %v432
      %v434 = vpop.f32.mrf.mxu0
      %435 = vmatprep.mubr.f32.mxu0 0.0
      %436 = vmatmul.mubr.f32.gmra.mxu0 %v289
      %v437 = vpop.f32.mrf.mxu0
      %v438 = vadd.f32 0.0, %v437
      %v439 = vpop.f32.mrf.mxu0
      %440 = vmatprep.mubr.f32.mxu0 0.0
      %441 = vmatmul.mubr.f32.gmra.mxu0 %v290
      %v442 = vpop.f32.mrf.mxu0
      %v443 = vadd.f32 0.0, %v442
      %v444 = vpop.f32.mrf.mxu0
      %445 = vmatprep.mubr.f32.mxu0 0.0
      %446 = vmatmul.mubr.f32.gmra.mxu0 %v291
      %v447 = vpop.f32.mrf.mxu0
      %v448 = vadd.f32 0.0, %v447
      %v449 = vpop.f32.mrf.mxu0
      %450 = vmatprep.mubr.f32.mxu0 0.0
      %451 = vmatmul.mubr.f32.gmra.mxu0 %v292
      %v452 = vpop.f32.mrf.mxu0
      %v453 = vadd.f32 0.0, %v452
      %v454 = vpop.f32.mrf.mxu0
      %455 = vmatprep.mubr.f32.mxu0 0.0
      %456 = vmatmul.mubr.f32.gmra.mxu0 %v293
      %v457 = vpop.f32.mrf.mxu0
      %v458 = vadd.f32 0.0, %v457
      %v459 = vpop.f32.mrf.mxu0
      %460 = vmatprep.mubr.f32.mxu0 0.0
      %461 = vmatmul.mubr.f32.gmra.mxu0 %v294
      %v462 = vpop.f32.mrf.mxu0
      %v463 = vadd.f32 0.0, %v462
      %v464 = vpop.f32.mrf.mxu0
      %465 = vmatprep.mubr.f32.mxu0 0.0
      %466 = vmatmul.mubr.f32.gmra.mxu0 %v295
      %v467 = vpop.f32.mrf.mxu0
      %v468 = vadd.f32 0.0, %v467
      %v469 = vpop.f32.mrf.mxu0
      %470 = vmatprep.mubr.f32.mxu0 0.0
      %471 = vmatmul.mubr.f32.gmra.mxu0 %v296
      %v472 = vpop.f32.mrf.mxu0
      %v473 = vadd.f32 0.0, %v472
      %v474 = vpop.f32.mrf.mxu0
      %475 = vmatprep.mubr.f32.mxu0 0.0
      %476 = vmatmul.mubr.f32.gmra.mxu0 %v297
      %v477 = vpop.f32.mrf.mxu0
      %v478 = vadd.f32 0.0, %v477
      %v479 = vpop.f32.mrf.mxu0
      %480 = vmatprep.mubr.f32.mxu0 0.0
      %481 = vmatmul.mubr.f32.gmra.mxu0 %v298
      %v482 = vpop.f32.mrf.mxu0
      %v483 = vadd.f32 0.0, %v482
      %v484 = vpop.f32.mrf.mxu0
      %485 = vmatprep.mubr.f32.mxu0 0.0
      %486 = vmatmul.mubr.f32.gmra.mxu0 %v299
      %v487 = vpop.f32.mrf.mxu0
      %v488 = vadd.f32 0.0, %v487
      %v489 = vpop.f32.mrf.mxu0
      %490 = vmatprep.mubr.f32.mxu0 0.0
      %491 = vmatmul.mubr.f32.gmra.mxu0 %v300
      %v492 = vpop.f32.mrf.mxu0
      %v493 = vadd.f32 0.0, %v492
      %v494 = vpop.f32.mrf.mxu0
      %495 = vmatprep.mubr.f32.mxu0 0.0
      %496 = vmatmul.mubr.f32.gmra.mxu0 %v301
      %v497 = vpop.f32.mrf.mxu0
      %v498 = vadd.f32 0.0, %v497
      %v499 = vpop.f32.mrf.mxu0
      %500 = vmatprep.mubr.f32.mxu0 0.0
      %501 = vmatmul.mubr.f32.gmra.mxu0 %v302
      %v502 = vpop.f32.mrf.mxu0
      %v503 = vadd.f32 0.0, %v502
      %v504 = vpop.f32.mrf.mxu0
      %505 = vmatprep.mubr.f32.mxu0 0.0
      %506 = vmatmul.mubr.f32.gmra.mxu0 %v303
      %v507 = vpop.f32.mrf.mxu0
      %v508 = vadd.f32 0.0, %v507
      %v509 = vpop.f32.mrf.mxu0
      %510 = vmatprep.mubr.f32.mxu0 0.0
      %511 = vmatmul.mubr.f32.gmra.mxu0 %v304
      %v512 = vpop.f32.mrf.mxu0
      %v513 = vadd.f32 0.0, %v512
      %v514 = vpop.f32.mrf.mxu0
      %515 = vmatprep.mubr.f32.mxu0 0.0
      %516 = vmatmul.mubr.f32.gmra.mxu0 %v305
      %v517 = vpop.f32.mrf.mxu0
      %v518 = vadd.f32 0.0, %v517
      %v519 = vpop.f32.mrf.mxu0
      %520 = vmatprep.mubr.f32.mxu0 0.0
      %521 = vmatmul.mubr.f32.gmra.mxu0 %v306
      %v522 = vpop.f32.mrf.mxu0
      %v523 = vadd.f32 0.0, %v522
      %v524 = vpop.f32.mrf.mxu0
      %525 = vmatprep.mubr.f32.mxu0 0.0
      %526 = vmatmul.mubr.f32.gmra.mxu0 %v307
      %v527 = vpop.f32.mrf.mxu0
      %v528 = vadd.f32 0.0, %v527
      %v529 = vpop.f32.mrf.mxu0
      %530 = vmatprep.mubr.f32.mxu0 0.0
      %531 = vmatmul.mubr.f32.gmra.mxu0 %v308
      %v532 = vpop.f32.mrf.mxu0
      %v533 = vadd.f32 0.0, %v532
      %v534 = vpop.f32.mrf.mxu0
      %535 = vmatprep.mubr.f32.mxu0 0.0
      %536 = vmatmul.mubr.f32.gmra.mxu0 %v309
      %v537 = vpop.f32.mrf.mxu0
      %v538 = vadd.f32 0.0, %v537
      %v539 = vpop.f32.mrf.mxu0
      %540 = vdwg.mxu0
      %v541 = vmax.f32 %v393, 0.0
      %v542 = vmax.f32 %v398, 0.0
      %v543 = vmax.f32 %v403, 0.0
      %v544 = vmax.f32 %v408, 0.0
      %v545 = vmax.f32 %v413, 0.0
      %v546 = vmax.f32 %v418, 0.0
      %v547 = vmax.f32 %v423, 0.0
      %v548 = vmax.f32 %v428, 0.0
      %v549 = vmax.f32 %v433, 0.0
      %v550 = vmax.f32 %v438, 0.0
      %v551 = vmax.f32 %v443, 0.0
      %v552 = vmax.f32 %v448, 0.0
      %v553 = vmax.f32 %v453, 0.0
      %v554 = vmax.f32 %v458, 0.0
      %v555 = vmax.f32 %v463, 0.0
      %v556 = vmax.f32 %v468, 0.0
      %v557 = vmax.f32 %v473, 0.0
      %v558 = vmax.f32 %v478, 0.0
      %v559 = vmax.f32 %v483, 0.0
      %v560 = vmax.f32 %v488, 0.0
      %v561 = vmax.f32 %v493, 0.0
      %v562 = vmax.f32 %v498, 0.0
      %v563 = vmax.f32 %v503, 0.0
      %v564 = vmax.f32 %v508, 0.0
      %v565 = vmax.f32 %v513, 0.0
      %v566 = vmax.f32 %v518, 0.0
      %v567 = vmax.f32 %v523, 0.0
      %v568 = vmax.f32 %v528, 0.0
      %v569 = vmax.f32 %v533, 0.0
      %v570 = vmax.f32 %v538, 0.0
      %v571 = vmin.f32 %v541, 6.0
      %v572 = vmin.f32 %v542, 6.0
      %v573 = vmin.f32 %v543, 6.0
      %v574 = vmin.f32 %v544, 6.0
      %v575 = vmin.f32 %v545, 6.0
      %v576 = vmin.f32 %v546, 6.0
      %v577 = vmin.f32 %v547, 6.0
      %v578 = vmin.f32 %v548, 6.0
      %v579 = vmin.f32 %v549, 6.0
      %v580 = vmin.f32 %v550, 6.0
      %v581 = vmin.f32 %v551, 6.0
      %v582 = vmin.f32 %v552, 6.0
      %v583 = vmin.f32 %v553, 6.0
      %v584 = vmin.f32 %v554, 6.0
      %v585 = vmin.f32 %v555, 6.0
      %v586 = vmin.f32 %v556, 6.0
      %v587 = vmin.f32 %v557, 6.0
      %v588 = vmin.f32 %v558, 6.0
      %v589 = vmin.f32 %v559, 6.0
      %v590 = vmin.f32 %v560, 6.0
      %v591 = vmin.f32 %v561, 6.0
      %v592 = vmin.f32 %v562, 6.0
      %v593 = vmin.f32 %v563, 6.0
      %v594 = vmin.f32 %v564, 6.0
      %v595 = vmin.f32 %v565, 6.0
      %v596 = vmin.f32 %v566, 6.0
      %v597 = vmin.f32 %v567, 6.0
      %v598 = vmin.f32 %v568, 6.0
      %v599 = vmin.f32 %v569, 6.0
      %v600 = vmin.f32 %v570, 6.0
      %v601 = vld [vmem:[%s2] sm:$0x7]
      %v602 = vld [vmem:[%s2 + $0x4] sm:$0x7]
      %v603 = vld [vmem:[%s2 + $0x8] sm:$0x7]
      %v604 = vlaneseq
      %v605 = vshrl.u32 %v604, 7
      %v606 = vsub.s32 0, %v605
      %v607 = vrot.slane %v601, %v606
      %v608 = vmul.f32 %v571, %v607
      %v609 = vmul.f32 %v572, %v607
      %v610 = vmul.f32 %v574, %v607
      %v611 = vmul.f32 %v575, %v607
      %v612 = vmul.f32 %v577, %v607
      %v613 = vmul.f32 %v578, %v607
      %v614 = vmul.f32 %v580, %v607
      %v615 = vmul.f32 %v581, %v607
      %v616 = vmul.f32 %v583, %v607
      %v617 = vmul.f32 %v584, %v607
      %v618 = vmul.f32 %v586, %v607
      %v619 = vmul.f32 %v587, %v607
      %v620 = vmul.f32 %v589, %v607
      %v621 = vmul.f32 %v590, %v607
      %v622 = vmul.f32 %v592, %v607
      %v623 = vmul.f32 %v593, %v607
      %v624 = vadd.f32 %v608, 0.0
      %v625 = vadd.f32 %v609, 0.0
      %v626 = vadd.f32 %v610, 0.0
      %v627 = vadd.f32 %v611, 0.0
      %v628 = vadd.f32 %v612, 0.0
      %v629 = vadd.f32 %v613, 0.0
      %v630 = vadd.f32 %v614, 0.0
      %v631 = vadd.f32 %v615, 0.0
      %v632 = vadd.f32 %v616, 0.0
      %v633 = vadd.f32 %v617, 0.0
      %v634 = vadd.f32 %v618, 0.0
      %v635 = vadd.f32 %v619, 0.0
      %v636 = vadd.f32 %v620, 0.0
      %v637 = vadd.f32 %v621, 0.0
      %v638 = vadd.f32 %v622, 0.0
      %v639 = vadd.f32 %v623, 0.0
      %v640 = vlaneseq
      %v641 = vshrl.u32 %v640, 7
      %v642 = vsub.s32 1, %v641
      %v643 = vrot.slane %v601, %v642
      %v644 = vmul.f32 %v571, %v643
      %v645 = vmul.f32 %v572, %v643
      %v646 = vmul.f32 %v573, %v643
      %v647 = vmul.f32 %v574, %v643
      %v648 = vmul.f32 %v575, %v643
      %v649 = vmul.f32 %v576, %v643
      %v650 = vmul.f32 %v577, %v643
      %v651 = vmul.f32 %v578, %v643
      %v652 = vmul.f32 %v579, %v643
      %v653 = vmul.f32 %v580, %v643
      %v654 = vmul.f32 %v581, %v643
      %v655 = vmul.f32 %v582, %v643
      %v656 = vmul.f32 %v583, %v643
      %v657 = vmul.f32 %v584, %v643
      %v658 = vmul.f32 %v585, %v643
      %v659 = vmul.f32 %v586, %v643
      %v660 = vmul.f32 %v587, %v643
      %v661 = vmul.f32 %v588, %v643
      %v662 = vmul.f32 %v589, %v643
      %v663 = vmul.f32 %v590, %v643
      %v664 = vmul.f32 %v591, %v643
      %v665 = vmul.f32 %v592, %v643
      %v666 = vmul.f32 %v593, %v643
      %v667 = vmul.f32 %v594, %v643
      %vm692 = vcmask 1046528
      %v693 = vrot.slane %v644, 1
      %v694 = vrot.slane %v645, 1
      %v695 = vsel %vm692, %v693, %v694
      %v696 = vrot.slane %v646, 1
      %v697 = vsel %vm692, %v694, %v696
      %v698 = vrot.slane %v647, 1
      %v699 = vrot.slane %v648, 1
      %v700 = vsel %vm692, %v698, %v699
      %v701 = vrot.slane %v649, 1
      %v702 = vsel %vm692, %v699, %v701
      %v703 = vrot.slane %v650, 1
      %v704 = vrot.slane %v651, 1
      %v705 = vsel %vm692, %v703, %v704
      %v706 = vrot.slane %v652, 1
      %v707 = vsel %vm692, %v704, %v706
      %v708 = vrot.slane %v653, 1
      %v709 = vrot.slane %v654, 1
      %v710 = vsel %vm692, %v708, %v709
      %v711 = vrot.slane %v655, 1
      %v712 = vsel %vm692, %v709, %v711
      %v713 = vrot.slane %v656, 1
      %v714 = vrot.slane %v657, 1
      %v715 = vsel %vm692, %v713, %v714
      %v716 = vrot.slane %v658, 1
      %v717 = vsel %vm692, %v714, %v716
      %v718 = vrot.slane %v659, 1
      %v719 = vrot.slane %v660, 1
      %v720 = vsel %vm692, %v718, %v719
      %v721 = vrot.slane %v661, 1
      %v722 = vsel %vm692, %v719, %v721
      %v723 = vrot.slane %v662, 1
      %v724 = vrot.slane %v663, 1
      %v725 = vsel %vm692, %v723, %v724
      %v726 = vrot.slane %v664, 1
      %v727 = vsel %vm692, %v724, %v726
      %v728 = vrot.slane %v665, 1
      %v729 = vrot.slane %v666, 1
      %v730 = vsel %vm692, %v728, %v729
      %v731 = vrot.slane %v667, 1
      %v732 = vsel %vm692, %v729, %v731
      %v749 = vadd.f32 %v624, %v695
      %v750 = vadd.f32 %v625, %v697
      %v751 = vadd.f32 %v626, %v700
      %v752 = vadd.f32 %v627, %v702
      %v753 = vadd.f32 %v628, %v705
      %v754 = vadd.f32 %v629, %v707
      %v755 = vadd.f32 %v630, %v710
      %v756 = vadd.f32 %v631, %v712
      %v757 = vadd.f32 %v632, %v715
      %v758 = vadd.f32 %v633, %v717
      %v759 = vadd.f32 %v634, %v720
      %v760 = vadd.f32 %v635, %v722
      %v761 = vadd.f32 %v636, %v725
      %v762 = vadd.f32 %v637, %v727
      %v763 = vadd.f32 %v638, %v730
      %v764 = vadd.f32 %v639, %v732
      %v765 = vlaneseq
      %v766 = vshrl.u32 %v765, 7
      %v767 = vsub.s32 2, %v766
      %v768 = vrot.slane %v601, %v767
      %v769 = vmul.f32 %v571, %v768
      %v770 = vmul.f32 %v572, %v768
      %v771 = vmul.f32 %v573, %v768
      %v772 = vmul.f32 %v574, %v768
      %v773 = vmul.f32 %v575, %v768
      %v774 = vmul.f32 %v576, %v768
      %v775 = vmul.f32 %v577, %v768
      %v776 = vmul.f32 %v578, %v768
      %v777 = vmul.f32 %v579, %v768
      %v778 = vmul.f32 %v580, %v768
      %v779 = vmul.f32 %v581, %v768
      %v780 = vmul.f32 %v582, %v768
      %v781 = vmul.f32 %v583, %v768
      %v782 = vmul.f32 %v584, %v768
      %v783 = vmul.f32 %v585, %v768
      %v784 = vmul.f32 %v586, %v768
      %v785 = vmul.f32 %v587, %v768
      %v786 = vmul.f32 %v588, %v768
      %v787 = vmul.f32 %v589, %v768
      %v788 = vmul.f32 %v590, %v768
      %v789 = vmul.f32 %v591, %v768
      %v790 = vmul.f32 %v592, %v768
      %v791 = vmul.f32 %v593, %v768
      %v792 = vmul.f32 %v594, %v768
      %vm817 = vcmask 1045504
      %v818 = vrot.slane %v769, 2
      %v819 = vrot.slane %v770, 2
      %v820 = vsel %vm817, %v818, %v819
      %v821 = vrot.slane %v771, 2
      %v822 = vsel %vm817, %v819, %v821
      %v823 = vrot.slane %v772, 2
      %v824 = vrot.slane %v773, 2
      %v825 = vsel %vm817, %v823, %v824
      %v826 = vrot.slane %v774, 2
      %v827 = vsel %vm817, %v824, %v826
      %v828 = vrot.slane %v775, 2
      %v829 = vrot.slane %v776, 2
      %v830 = vsel %vm817, %v828, %v829
      %v831 = vrot.slane %v777, 2
      %v832 = vsel %vm817, %v829, %v831
      %v833 = vrot.slane %v778, 2
      %v834 = vrot.slane %v779, 2
      %v835 = vsel %vm817, %v833, %v834
      %v836 = vrot.slane %v780, 2
      %v837 = vsel %vm817, %v834, %v836
      %v838 = vrot.slane %v781, 2
      %v839 = vrot.slane %v782, 2
      %v840 = vsel %vm817, %v838, %v839
      %v841 = vrot.slane %v783, 2
      %v842 = vsel %vm817, %v839, %v841
      %v843 = vrot.slane %v784, 2
      %v844 = vrot.slane %v785, 2
      %v845 = vsel %vm817, %v843, %v844
      %v846 = vrot.slane %v786, 2
      %v847 = vsel %vm817, %v844, %v846
      %v848 = vrot.slane %v787, 2
      %v849 = vrot.slane %v788, 2
      %v850 = vsel %vm817, %v848, %v849
      %v851 = vrot.slane %v789, 2
      %v852 = vsel %vm817, %v849, %v851
      %v853 = vrot.slane %v790, 2
      %v854 = vrot.slane %v791, 2
      %v855 = vsel %vm817, %v853, %v854
      %v856 = vrot.slane %v792, 2
      %v857 = vsel %vm817, %v854, %v856
      %v874 = vadd.f32 %v749, %v820
      %v875 = vadd.f32 %v750, %v822
      %v876 = vadd.f32 %v751, %v825
      %v877 = vadd.f32 %v752, %v827
      %v878 = vadd.f32 %v753, %v830
      %v879 = vadd.f32 %v754, %v832
      %v880 = vadd.f32 %v755, %v835
      %v881 = vadd.f32 %v756, %v837
      %v882 = vadd.f32 %v757, %v840
      %v883 = vadd.f32 %v758, %v842
      %v884 = vadd.f32 %v759, %v845
      %v885 = vadd.f32 %v760, %v847
      %v886 = vadd.f32 %v761, %v850
      %v887 = vadd.f32 %v762, %v852
      %v888 = vadd.f32 %v763, %v855
      %v889 = vadd.f32 %v764, %v857
      %v890 = vlaneseq
      %v891 = vshrl.u32 %v890, 7
      %v892 = vsub.s32 0, %v891
      %v893 = vrot.slane %v602, %v892
      %v894 = vmul.f32 %v574, %v893
      %v895 = vmul.f32 %v575, %v893
      %v896 = vmul.f32 %v577, %v893
      %v897 = vmul.f32 %v578, %v893
      %v898 = vmul.f32 %v580, %v893
      %v899 = vmul.f32 %v581, %v893
      %v900 = vmul.f32 %v583, %v893
      %v901 = vmul.f32 %v584, %v893
      %v902 = vmul.f32 %v586, %v893
      %v903 = vmul.f32 %v587, %v893
      %v904 = vmul.f32 %v589, %v893
      %v905 = vmul.f32 %v590, %v893
      %v906 = vmul.f32 %v592, %v893
      %v907 = vmul.f32 %v593, %v893
      %v908 = vmul.f32 %v595, %v893
      %v909 = vmul.f32 %v596, %v893
      %v910 = vadd.f32 %v874, %v894
      %v911 = vadd.f32 %v875, %v895
      %v912 = vadd.f32 %v876, %v896
      %v913 = vadd.f32 %v877, %v897
      %v914 = vadd.f32 %v878, %v898
      %v915 = vadd.f32 %v879, %v899
      %v916 = vadd.f32 %v880, %v900
      %v917 = vadd.f32 %v881, %v901
      %v918 = vadd.f32 %v882, %v902
      %v919 = vadd.f32 %v883, %v903
      %v920 = vadd.f32 %v884, %v904
      %v921 = vadd.f32 %v885, %v905
      %v922 = vadd.f32 %v886, %v906
      %v923 = vadd.f32 %v887, %v907
      %v924 = vadd.f32 %v888, %v908
      %v925 = vadd.f32 %v889, %v909
      %v926 = vlaneseq
      %v927 = vshrl.u32 %v926, 7
      %v928 = vsub.s32 1, %v927
      %v929 = vrot.slane %v602, %v928
      %v930 = vmul.f32 %v574, %v929
      %v931 = vmul.f32 %v575, %v929
      %v932 = vmul.f32 %v576, %v929
      %v933 = vmul.f32 %v577, %v929
      %v934 = vmul.f32 %v578, %v929
      %v935 = vmul.f32 %v579, %v929
      %v936 = vmul.f32 %v580, %v929
      %v937 = vmul.f32 %v581, %v929
      %v938 = vmul.f32 %v582, %v929
      %v939 = vmul.f32 %v583, %v929
      %v940 = vmul.f32 %v584, %v929
      %v941 = vmul.f32 %v585, %v929
      %v942 = vmul.f32 %v586, %v929
      %v943 = vmul.f32 %v587, %v929
      %v944 = vmul.f32 %v588, %v929
      %v945 = vmul.f32 %v589, %v929
      %v946 = vmul.f32 %v590, %v929
      %v947 = vmul.f32 %v591, %v929
      %v948 = vmul.f32 %v592, %v929
      %v949 = vmul.f32 %v593, %v929
      %v950 = vmul.f32 %v594, %v929
      %v951 = vmul.f32 %v595, %v929
      %v952 = vmul.f32 %v596, %v929
      %v953 = vmul.f32 %v597, %v929
      %v978 = vrot.slane %v930, 1
      %v979 = vrot.slane %v931, 1
      %v980 = vsel %vm692, %v978, %v979
      %v981 = vrot.slane %v932, 1
      %v982 = vsel %vm692, %v979, %v981
      %v983 = vrot.slane %v933, 1
      %v984 = vrot.slane %v934, 1
      %v985 = vsel %vm692, %v983, %v984
      %v986 = vrot.slane %v935, 1
      %v987 = vsel %vm692, %v984, %v986
      %v988 = vrot.slane %v936, 1
      %v989 = vrot.slane %v937, 1
      %v990 = vsel %vm692, %v988, %v989
      %v991 = vrot.slane %v938, 1
      %v992 = vsel %vm692, %v989, %v991
      %v993 = vrot.slane %v939, 1
      %v994 = vrot.slane %v940, 1
      %v995 = vsel %vm692, %v993, %v994
      %v996 = vrot.slane %v941, 1
      %v997 = vsel %vm692, %v994, %v996
      %v998 = vrot.slane %v942, 1
      %v999 = vrot.slane %v943, 1
      %v1000 = vsel %vm692, %v998, %v999
      %v1001 = vrot.slane %v944, 1
      %v1002 = vsel %vm692, %v999, %v1001
      %v1003 = vrot.slane %v945, 1
      %v1004 = vrot.slane %v946, 1
      %v1005 = vsel %vm692, %v1003, %v1004
      %v1006 = vrot.slane %v947, 1
      %v1007 = vsel %vm692, %v1004, %v1006
      %v1008 = vrot.slane %v948, 1
      %v1009 = vrot.slane %v949, 1
      %v1010 = vsel %vm692, %v1008, %v1009
      %v1011 = vrot.slane %v950, 1
      %v1012 = vsel %vm692, %v1009, %v1011
      %v1013 = vrot.slane %v951, 1
      %v1014 = vrot.slane %v952, 1
      %v1015 = vsel %vm692, %v1013, %v1014
      %v1016 = vrot.slane %v953, 1
      %v1017 = vsel %vm692, %v1014, %v1016
      %v1034 = vadd.f32 %v910, %v980
      %v1035 = vadd.f32 %v911, %v982
      %v1036 = vadd.f32 %v912, %v985
      %v1037 = vadd.f32 %v913, %v987
      %v1038 = vadd.f32 %v914, %v990
      %v1039 = vadd.f32 %v915, %v992
      %v1040 = vadd.f32 %v916, %v995
      %v1041 = vadd.f32 %v917, %v997
      %v1042 = vadd.f32 %v918, %v1000
      %v1043 = vadd.f32 %v919, %v1002
      %v1044 = vadd.f32 %v920, %v1005
      %v1045 = vadd.f32 %v921, %v1007
      %v1046 = vadd.f32 %v922, %v1010
      %v1047 = vadd.f32 %v923, %v1012
      %v1048 = vadd.f32 %v924, %v1015
      %v1049 = vadd.f32 %v925, %v1017
      %v1050 = vlaneseq
      %v1051 = vshrl.u32 %v1050, 7
      %v1052 = vsub.s32 2, %v1051
      %v1053 = vrot.slane %v602, %v1052
      %v1054 = vmul.f32 %v574, %v1053
      %v1055 = vmul.f32 %v575, %v1053
      %v1056 = vmul.f32 %v576, %v1053
      %v1057 = vmul.f32 %v577, %v1053
      %v1058 = vmul.f32 %v578, %v1053
      %v1059 = vmul.f32 %v579, %v1053
      %v1060 = vmul.f32 %v580, %v1053
      %v1061 = vmul.f32 %v581, %v1053
      %v1062 = vmul.f32 %v582, %v1053
      %v1063 = vmul.f32 %v583, %v1053
      %v1064 = vmul.f32 %v584, %v1053
      %v1065 = vmul.f32 %v585, %v1053
      %v1066 = vmul.f32 %v586, %v1053
      %v1067 = vmul.f32 %v587, %v1053
      %v1068 = vmul.f32 %v588, %v1053
      %v1069 = vmul.f32 %v589, %v1053
      %v1070 = vmul.f32 %v590, %v1053
      %v1071 = vmul.f32 %v591, %v1053
      %v1072 = vmul.f32 %v592, %v1053
      %v1073 = vmul.f32 %v593, %v1053
      %v1074 = vmul.f32 %v594, %v1053
      %v1075 = vmul.f32 %v595, %v1053
      %v1076 = vmul.f32 %v596, %v1053
      %v1077 = vmul.f32 %v597, %v1053
      %v1102 = vrot.slane %v1054, 2
      %v1103 = vrot.slane %v1055, 2
      %v1104 = vsel %vm817, %v1102, %v1103
      %v1105 = vrot.slane %v1056, 2
      %v1106 = vsel %vm817, %v1103, %v1105
      %v1107 = vrot.slane %v1057, 2
      %v1108 = vrot.slane %v1058, 2
      %v1109 = vsel %vm817, %v1107, %v1108
      %v1110 = vrot.slane %v1059, 2
      %v1111 = vsel %vm817, %v1108, %v1110
      %v1112 = vrot.slane %v1060, 2
      %v1113 = vrot.slane %v1061, 2
      %v1114 = vsel %vm817, %v1112, %v1113
      %v1115 = vrot.slane %v1062, 2
      %v1116 = vsel %vm817, %v1113, %v1115
      %v1117 = vrot.slane %v1063, 2
      %v1118 = vrot.slane %v1064, 2
      %v1119 = vsel %vm817, %v1117, %v1118
      %v1120 = vrot.slane %v1065, 2
      %v1121 = vsel %vm817, %v1118, %v1120
      %v1122 = vrot.slane %v1066, 2
      %v1123 = vrot.slane %v1067, 2
      %v1124 = vsel %vm817, %v1122, %v1123
      %v1125 = vrot.slane %v1068, 2
      %v1126 = vsel %vm817, %v1123, %v1125
      %v1127 = vrot.slane %v1069, 2
      %v1128 = vrot.slane %v1070, 2
      %v1129 = vsel %vm817, %v1127, %v1128
      %v1130 = vrot.slane %v1071, 2
      %v1131 = vsel %vm817, %v1128, %v1130
      %v1132 = vrot.slane %v1072, 2
      %v1133 = vrot.slane %v1073, 2
      %v1134 = vsel %vm817, %v1132, %v1133
      %v1135 = vrot.slane %v1074, 2
      %v1136 = vsel %vm817, %v1133, %v1135
      %v1137 = vrot.slane %v1075, 2
      %v1138 = vrot.slane %v1076, 2
      %v1139 = vsel %vm817, %v1137, %v1138
      %v1140 = vrot.slane %v1077, 2
      %v1141 = vsel %vm817, %v1138, %v1140
      %v1158 = vadd.f32 %v1034, %v1104
      %v1159 = vadd.f32 %v1035, %v1106
      %v1160 = vadd.f32 %v1036, %v1109
      %v1161 = vadd.f32 %v1037, %v1111
      %v1162 = vadd.f32 %v1038, %v1114
      %v1163 = vadd.f32 %v1039, %v1116
      %v1164 = vadd.f32 %v1040, %v1119
      %v1165 = vadd.f32 %v1041, %v1121
      %v1166 = vadd.f32 %v1042, %v1124
      %v1167 = vadd.f32 %v1043, %v1126
      %v1168 = vadd.f32 %v1044, %v1129
      %v1169 = vadd.f32 %v1045, %v1131
      %v1170 = vadd.f32 %v1046, %v1134
      %v1171 = vadd.f32 %v1047, %v1136
      %v1172 = vadd.f32 %v1048, %v1139
      %v1173 = vadd.f32 %v1049, %v1141
      %v1174 = vlaneseq
      %v1175 = vshrl.u32 %v1174, 7
      %v1176 = vsub.s32 0, %v1175
      %v1177 = vrot.slane %v603, %v1176
      %v1178 = vmul.f32 %v577, %v1177
      %v1179 = vmul.f32 %v578, %v1177
      %v1180 = vmul.f32 %v580, %v1177
      %v1181 = vmul.f32 %v581, %v1177
      %v1182 = vmul.f32 %v583, %v1177
      %v1183 = vmul.f32 %v584, %v1177
      %v1184 = vmul.f32 %v586, %v1177
      %v1185 = vmul.f32 %v587, %v1177
      %v1186 = vmul.f32 %v589, %v1177
      %v1187 = vmul.f32 %v590, %v1177
      %v1188 = vmul.f32 %v592, %v1177
      %v1189 = vmul.f32 %v593, %v1177
      %v1190 = vmul.f32 %v595, %v1177
      %v1191 = vmul.f32 %v596, %v1177
      %v1192 = vmul.f32 %v598, %v1177
      %v1193 = vmul.f32 %v599, %v1177
      %v1194 = vadd.f32 %v1158, %v1178
      %v1195 = vadd.f32 %v1159, %v1179
      %v1196 = vadd.f32 %v1160, %v1180
      %v1197 = vadd.f32 %v1161, %v1181
      %v1198 = vadd.f32 %v1162, %v1182
      %v1199 = vadd.f32 %v1163, %v1183
      %v1200 = vadd.f32 %v1164, %v1184
      %v1201 = vadd.f32 %v1165, %v1185
      %v1202 = vadd.f32 %v1166, %v1186
      %v1203 = vadd.f32 %v1167, %v1187
      %v1204 = vadd.f32 %v1168, %v1188
      %v1205 = vadd.f32 %v1169, %v1189
      %v1206 = vadd.f32 %v1170, %v1190
      %v1207 = vadd.f32 %v1171, %v1191
      %v1208 = vadd.f32 %v1172, %v1192
      %v1209 = vadd.f32 %v1173, %v1193
      %v1210 = vlaneseq
      %v1211 = vshrl.u32 %v1210, 7
      %v1212 = vsub.s32 1, %v1211
      %v1213 = vrot.slane %v603, %v1212
      %v1214 = vmul.f32 %v577, %v1213
      %v1215 = vmul.f32 %v578, %v1213
      %v1216 = vmul.f32 %v579, %v1213
      %v1217 = vmul.f32 %v580, %v1213
      %v1218 = vmul.f32 %v581, %v1213
      %v1219 = vmul.f32 %v582, %v1213
      %v1220 = vmul.f32 %v583, %v1213
      %v1221 = vmul.f32 %v584, %v1213
      %v1222 = vmul.f32 %v585, %v1213
      %v1223 = vmul.f32 %v586, %v1213
      %v1224 = vmul.f32 %v587, %v1213
      %v1225 = vmul.f32 %v588, %v1213
      %v1226 = vmul.f32 %v589, %v1213
      %v1227 = vmul.f32 %v590, %v1213
      %v1228 = vmul.f32 %v591, %v1213
      %v1229 = vmul.f32 %v592, %v1213
      %v1230 = vmul.f32 %v593, %v1213
      %v1231 = vmul.f32 %v594, %v1213
      %v1232 = vmul.f32 %v595, %v1213
      %v1233 = vmul.f32 %v596, %v1213
      %v1234 = vmul.f32 %v597, %v1213
      %v1235 = vmul.f32 %v598, %v1213
      %v1236 = vmul.f32 %v599, %v1213
      %v1237 = vmul.f32 %v600, %v1213
      %v1262 = vrot.slane %v1214, 1
      %v1263 = vrot.slane %v1215, 1
      %v1264 = vsel %vm692, %v1262, %v1263
      %v1265 = vrot.slane %v1216, 1
      %v1266 = vsel %vm692, %v1263, %v1265
      %v1267 = vrot.slane %v1217, 1
      %v1268 = vrot.slane %v1218, 1
      %v1269 = vsel %vm692, %v1267, %v1268
      %v1270 = vrot.slane %v1219, 1
      %v1271 = vsel %vm692, %v1268, %v1270
      %v1272 = vrot.slane %v1220, 1
      %v1273 = vrot.slane %v1221, 1
      %v1274 = vsel %vm692, %v1272, %v1273
      %v1275 = vrot.slane %v1222, 1
      %v1276 = vsel %vm692, %v1273, %v1275
      %v1277 = vrot.slane %v1223, 1
      %v1278 = vrot.slane %v1224, 1
      %v1279 = vsel %vm692, %v1277, %v1278
      %v1280 = vrot.slane %v1225, 1
      %v1281 = vsel %vm692, %v1278, %v1280
      %v1282 = vrot.slane %v1226, 1
      %v1283 = vrot.slane %v1227, 1
      %v1284 = vsel %vm692, %v1282, %v1283
      %v1285 = vrot.slane %v1228, 1
      %v1286 = vsel %vm692, %v1283, %v1285
      %v1287 = vrot.slane %v1229, 1
      %v1288 = vrot.slane %v1230, 1
      %v1289 = vsel %vm692, %v1287, %v1288
      %v1290 = vrot.slane %v1231, 1
      %v1291 = vsel %vm692, %v1288, %v1290
      %v1292 = vrot.slane %v1232, 1
      %v1293 = vrot.slane %v1233, 1
      %v1294 = vsel %vm692, %v1292, %v1293
      %v1295 = vrot.slane %v1234, 1
      %v1296 = vsel %vm692, %v1293, %v1295
      %v1297 = vrot.slane %v1235, 1
      %v1298 = vrot.slane %v1236, 1
      %v1299 = vsel %vm692, %v1297, %v1298
      %v1300 = vrot.slane %v1237, 1
      %v1301 = vsel %vm692, %v1298, %v1300
      %v1318 = vadd.f32 %v1194, %v1264
      %v1319 = vadd.f32 %v1195, %v1266
      %v1320 = vadd.f32 %v1196, %v1269
      %v1321 = vadd.f32 %v1197, %v1271
      %v1322 = vadd.f32 %v1198, %v1274
      %v1323 = vadd.f32 %v1199, %v1276
      %v1324 = vadd.f32 %v1200, %v1279
      %v1325 = vadd.f32 %v1201, %v1281
      %v1326 = vadd.f32 %v1202, %v1284
      %v1327 = vadd.f32 %v1203, %v1286
      %v1328 = vadd.f32 %v1204, %v1289
      %v1329 = vadd.f32 %v1205, %v1291
      %v1330 = vadd.f32 %v1206, %v1294
      %v1331 = vadd.f32 %v1207, %v1296
      %v1332 = vadd.f32 %v1208, %v1299
      %v1333 = vadd.f32 %v1209, %v1301
      %v1334 = vlaneseq
      %v1335 = vshrl.u32 %v1334, 7
      %v1336 = vsub.s32 2, %v1335
      %v1337 = vrot.slane %v603, %v1336
      %v1338 = vmul.f32 %v577, %v1337
      %v1339 = vmul.f32 %v578, %v1337
      %v1340 = vmul.f32 %v579, %v1337
      %v1341 = vmul.f32 %v580, %v1337
      %v1342 = vmul.f32 %v581, %v1337
      %v1343 = vmul.f32 %v582, %v1337
      %v1344 = vmul.f32 %v583, %v1337
      %v1345 = vmul.f32 %v584, %v1337
      %v1346 = vmul.f32 %v585, %v1337
      %v1347 = vmul.f32 %v586, %v1337
      %v1348 = vmul.f32 %v587, %v1337
      %v1349 = vmul.f32 %v588, %v1337
      %v1350 = vmul.f32 %v589, %v1337
      %v1351 = vmul.f32 %v590, %v1337
      %v1352 = vmul.f32 %v591, %v1337
      %v1353 = vmul.f32 %v592, %v1337
      %v1354 = vmul.f32 %v593, %v1337
      %v1355 = vmul.f32 %v594, %v1337
      %v1356 = vmul.f32 %v595, %v1337
      %v1357 = vmul.f32 %v596, %v1337
      %v1358 = vmul.f32 %v597, %v1337
      %v1359 = vmul.f32 %v598, %v1337
      %v1360 = vmul.f32 %v599, %v1337
      %v1361 = vmul.f32 %v600, %v1337
      %v1386 = vrot.slane %v1338, 2
      %v1387 = vrot.slane %v1339, 2
      %v1388 = vsel %vm817, %v1386, %v1387
      %v1389 = vrot.slane %v1340, 2
      %v1390 = vsel %vm817, %v1387, %v1389
      %v1391 = vrot.slane %v1341, 2
      %v1392 = vrot.slane %v1342, 2
      %v1393 = vsel %vm817, %v1391, %v1392
      %v1394 = vrot.slane %v1343, 2
      %v1395 = vsel %vm817, %v1392, %v1394
      %v1396 = vrot.slane %v1344, 2
      %v1397 = vrot.slane %v1345, 2
      %v1398 = vsel %vm817, %v1396, %v1397
      %v1399 = vrot.slane %v1346, 2
      %v1400 = vsel %vm817, %v1397, %v1399
      %v1401 = vrot.slane %v1347, 2
      %v1402 = vrot.slane %v1348, 2
      %v1403 = vsel %vm817, %v1401, %v1402
      %v1404 = vrot.slane %v1349, 2
      %v1405 = vsel %vm817, %v1402, %v1404
      %v1406 = vrot.slane %v1350, 2
      %v1407 = vrot.slane %v1351, 2
      %v1408 = vsel %vm817, %v1406, %v1407
      %v1409 = vrot.slane %v1352, 2
      %v1410 = vsel %vm817, %v1407, %v1409
      %v1411 = vrot.slane %v1353, 2
      %v1412 = vrot.slane %v1354, 2
      %v1413 = vsel %vm817, %v1411, %v1412
      %v1414 = vrot.slane %v1355, 2
      %v1415 = vsel %vm817, %v1412, %v1414
      %v1416 = vrot.slane %v1356, 2
      %v1417 = vrot.slane %v1357, 2
      %v1418 = vsel %vm817, %v1416, %v1417
      %v1419 = vrot.slane %v1358, 2
      %v1420 = vsel %vm817, %v1417, %v1419
      %v1421 = vrot.slane %v1359, 2
      %v1422 = vrot.slane %v1360, 2
      %v1423 = vsel %vm817, %v1421, %v1422
      %v1424 = vrot.slane %v1361, 2
      %v1425 = vsel %vm817, %v1422, %v1424
      %v1442 = vadd.f32 %v1318, %v1388
      %v1443 = vadd.f32 %v1319, %v1390
      %v1444 = vadd.f32 %v1320, %v1393
      %v1445 = vadd.f32 %v1321, %v1395
      %v1446 = vadd.f32 %v1322, %v1398
      %v1447 = vadd.f32 %v1323, %v1400
      %v1448 = vadd.f32 %v1324, %v1403
      %v1449 = vadd.f32 %v1325, %v1405
      %v1450 = vadd.f32 %v1326, %v1408
      %v1451 = vadd.f32 %v1327, %v1410
      %v1452 = vadd.f32 %v1328, %v1413
      %v1453 = vadd.f32 %v1329, %v1415
      %v1454 = vadd.f32 %v1330, %v1418
      %v1455 = vadd.f32 %v1331, %v1420
      %v1456 = vadd.f32 %v1332, %v1423
      %v1457 = vadd.f32 %v1333, %v1425
      %v1458 = vld [vmem:[%s3] sm:$0x1]
      %v1460 = vlaneseq
      %v1461 = vshrl.u32 %v1460, 7
      %v1462 = vsub.s32 0, %v1461
      %v1463 = vrot.slane %v1458, %v1462
      %v1465 = vadd.f32 %v1442, %v1463
      %v1466 = vadd.f32 %v1443, %v1463
      %v1467 = vadd.f32 %v1444, %v1463
      %v1468 = vadd.f32 %v1445, %v1463
      %v1469 = vadd.f32 %v1446, %v1463
      %v1470 = vadd.f32 %v1447, %v1463
      %v1471 = vadd.f32 %v1448, %v1463
      %v1472 = vadd.f32 %v1449, %v1463
      %v1473 = vadd.f32 %v1450, %v1463
      %v1474 = vadd.f32 %v1451, %v1463
      %v1475 = vadd.f32 %v1452, %v1463
      %v1476 = vadd.f32 %v1453, %v1463
      %v1477 = vadd.f32 %v1454, %v1463
      %v1478 = vadd.f32 %v1455, %v1463
      %v1479 = vadd.f32 %v1456, %v1463
      %v1480 = vadd.f32 %v1457, %v1463
      %v1481 = vmax.f32 %v1465, 0.0
      %v1482 = vmax.f32 %v1466, 0.0
      %v1483 = vmax.f32 %v1467, 0.0
      %v1484 = vmax.f32 %v1468, 0.0
      %v1485 = vmax.f32 %v1469, 0.0
      %v1486 = vmax.f32 %v1470, 0.0
      %v1487 = vmax.f32 %v1471, 0.0
      %v1488 = vmax.f32 %v1472, 0.0
      %v1489 = vmax.f32 %v1473, 0.0
      %v1490 = vmax.f32 %v1474, 0.0
      %v1491 = vmax.f32 %v1475, 0.0
      %v1492 = vmax.f32 %v1476, 0.0
      %v1493 = vmax.f32 %v1477, 0.0
      %v1494 = vmax.f32 %v1478, 0.0
      %v1495 = vmax.f32 %v1479, 0.0
      %v1496 = vmax.f32 %v1480, 0.0
      %v1497 = vmin.f32 %v1481, 6.0
      %v1498 = vmin.f32 %v1482, 6.0
      %v1499 = vmin.f32 %v1483, 6.0
      %v1500 = vmin.f32 %v1484, 6.0
      %v1501 = vmin.f32 %v1485, 6.0
      %v1502 = vmin.f32 %v1486, 6.0
      %v1503 = vmin.f32 %v1487, 6.0
      %v1504 = vmin.f32 %v1488, 6.0
      %v1505 = vmin.f32 %v1489, 6.0
      %v1506 = vmin.f32 %v1490, 6.0
      %v1507 = vmin.f32 %v1491, 6.0
      %v1508 = vmin.f32 %v1492, 6.0
      %v1509 = vmin.f32 %v1493, 6.0
      %v1510 = vmin.f32 %v1494, 6.0
      %v1511 = vmin.f32 %v1495, 6.0
      %v1512 = vmin.f32 %v1496, 6.0
      %v1513 = vld [vmem:[%s4] sm:$0xff]
      %v1514 = vld [vmem:[%s4 + $0x8] sm:$0xff]
      %v1515 = vld [vmem:[%s4 + $0x10] sm:$0xff]
      %v1516 = vld [vmem:[%s4 + $0x18] sm:$0xff]
      %v1517 = vld [vmem:[%s4 + $0x20] sm:$0xff]
      %v1518 = vld [vmem:[%s4 + $0x28] sm:$0xff]
      %v1519 = vld [vmem:[%s4 + $0x30] sm:$0xff]
      %v1520 = vld [vmem:[%s4 + $0x38] sm:$0xff]
      %v1521 = vld [vmem:[%s4 + $0x40] sm:$0xff]
      %v1522 = vld [vmem:[%s4 + $0x48] sm:$0xff]
      %v1523 = vld [vmem:[%s4 + $0x50] sm:$0xff]
      %v1524 = vld [vmem:[%s4 + $0x58] sm:$0xff]
      %v1525 = vld [vmem:[%s4 + $0x60] sm:$0xff]
      %v1526 = vld [vmem:[%s4 + $0x68] sm:$0xff]
      %v1527 = vld [vmem:[%s4 + $0x70] sm:$0xff]
      %v1528 = vld [vmem:[%s4 + $0x78] sm:$0xff]
      %v1529 = vld [vmem:[%s5] sm:$0x1]
      %v1531 = vlaneseq
      %v1532 = vshrl.u32 %v1531, 7
      %v1533 = vsub.s32 0, %v1532
      %v1534 = vrot.slane %v1529, %v1533
      %1536 = vmatprep.subr.mxu0 0.0
      %1537 = vmatpush1.msra.mxu0 %v1528
      %1538 = vmatprep.subr.mxu0 0.0
      %1539 = vmatpush1.msra.mxu0 %v1527
      %1540 = vmatprep.subr.mxu0 0.0
      %1541 = vmatpush1.msra.mxu0 %v1526
      %1542 = vmatprep.subr.mxu0 0.0
      %1543 = vmatpush1.msra.mxu0 %v1525
      %1544 = vmatprep.subr.mxu0 0.0
      %1545 = vmatpush1.msra.mxu0 %v1524
      %1546 = vmatprep.subr.mxu0 0.0
      %1547 = vmatpush1.msra.mxu0 %v1523
      %1548 = vmatprep.subr.mxu0 0.0
      %1549 = vmatpush1.msra.mxu0 %v1522
      %1550 = vmatprep.subr.mxu0 0.0
      %1551 = vmatpush1.msra.mxu0 %v1521
      %1552 = vmatprep.subr.mxu0 0.0
      %1553 = vmatpush1.msra.mxu0 %v1520
      %1554 = vmatprep.subr.mxu0 0.0
      %1555 = vmatpush1.msra.mxu0 %v1519
      %1556 = vmatprep.subr.mxu0 0.0
      %1557 = vmatpush1.msra.mxu0 %v1518
      %1558 = vmatprep.subr.mxu0 0.0
      %1559 = vmatpush1.msra.mxu0 %v1517
      %1560 = vmatprep.subr.mxu0 0.0
      %1561 = vmatpush1.msra.mxu0 %v1516
      %1562 = vmatprep.subr.mxu0 0.0
      %1563 = vmatpush1.msra.mxu0 %v1515
      %1564 = vmatprep.subr.mxu0 0.0
      %1565 = vmatpush1.msra.mxu0 %v1514
      %1566 = vmatprep.subr.mxu0 0.0
      %1567 = vmatpush1.msra.mxu0 %v1513
      %1568 = vmatprep.subr.mxu0 0.0
      %1569 = vmatpush2.msra.mxu0 0.0
      %1570 = vmatprep.subr.mxu0 0.0
      %1571 = vmatpush2.msra.mxu0 0.0
      %1572 = vmatprep.subr.mxu0 0.0
      %1573 = vmatpush2.msra.mxu0 0.0
      %1574 = vmatprep.subr.mxu0 0.0
      %1575 = vmatpush2.msra.mxu0 0.0
      %1576 = vmatprep.subr.mxu0 0.0
      %1577 = vmatpush2.msra.mxu0 0.0
      %1578 = vmatprep.subr.mxu0 0.0
      %1579 = vmatpush2.msra.mxu0 0.0
      %1580 = vmatprep.subr.mxu0 0.0
      %1581 = vmatpush2.msra.mxu0 0.0
      %1582 = vmatprep.subr.mxu0 0.0
      %1583 = vmatpush2.msra.mxu0 0.0
      %1584 = vmatprep.subr.mxu0 0.0
      %1585 = vmatpush2.msra.mxu0 0.0
      %1586 = vmatprep.subr.mxu0 0.0
      %1587 = vmatpush2.msra.mxu0 0.0
      %1588 = vmatprep.subr.mxu0 0.0
      %1589 = vmatpush2.msra.mxu0 0.0
      %1590 = vmatprep.subr.mxu0 0.0
      %1591 = vmatpush2.msra.mxu0 0.0
      %1592 = vmatprep.subr.mxu0 0.0
      %1593 = vmatpush2.msra.mxu0 0.0
      %1594 = vmatprep.subr.mxu0 0.0
      %1595 = vmatpush2.msra.mxu0 0.0
      %1596 = vmatprep.subr.mxu0 0.0
      %1597 = vmatpush2.msra.mxu0 0.0
      %1598 = vmatprep.subr.mxu0 0.0
      %1599 = vmatpush2.msra.mxu0 0.0
      %1600 = vmatprep.mubr.f32.mxu0 0.0
      %1601 = vmatmul.mubr.f32.gmra.mxu0 %v1497
      %v1602 = vpop.f32.mrf.mxu0
      %v1603 = vadd.f32 %v1534, %v1602
      %v1604 = vpop.f32.mrf.mxu0
      %1605 = vmatprep.mubr.f32.mxu0 0.0
      %1606 = vmatmul.mubr.f32.gmra.mxu0 %v1498
      %v1607 = vpop.f32.mrf.mxu0
      %v1608 = vadd.f32 %v1534, %v1607
      %v1609 = vpop.f32.mrf.mxu0
      %1610 = vmatprep.mubr.f32.mxu0 0.0
      %1611 = vmatmul.mubr.f32.gmra.mxu0 %v1499
      %v1612 = vpop.f32.mrf.mxu0
      %v1613 = vadd.f32 %v1534, %v1612
      %v1614 = vpop.f32.mrf.mxu0
      %1615 = vmatprep.mubr.f32.mxu0 0.0
      %1616 = vmatmul.mubr.f32.gmra.mxu0 %v1500
      %v1617 = vpop.f32.mrf.mxu0
      %v1618 = vadd.f32 %v1534, %v1617
      %v1619 = vpop.f32.mrf.mxu0
      %1620 = vmatprep.mubr.f32.mxu0 0.0
      %1621 = vmatmul.mubr.f32.gmra.mxu0 %v1501
      %v1622 = vpop.f32.mrf.mxu0
      %v1623 = vadd.f32 %v1534, %v1622
      %v1624 = vpop.f32.mrf.mxu0
      %1625 = vmatprep.mubr.f32.mxu0 0.0
      %1626 = vmatmul.mubr.f32.gmra.mxu0 %v1502
      %v1627 = vpop.f32.mrf.mxu0
      %v1628 = vadd.f32 %v1534, %v1627
      %v1629 = vpop.f32.mrf.mxu0
      %1630 = vmatprep.mubr.f32.mxu0 0.0
      %1631 = vmatmul.mubr.f32.gmra.mxu0 %v1503
      %v1632 = vpop.f32.mrf.mxu0
      %v1633 = vadd.f32 %v1534, %v1632
      %v1634 = vpop.f32.mrf.mxu0
      %1635 = vmatprep.mubr.f32.mxu0 0.0
      %1636 = vmatmul.mubr.f32.gmra.mxu0 %v1504
      %v1637 = vpop.f32.mrf.mxu0
      %v1638 = vadd.f32 %v1534, %v1637
      %v1639 = vpop.f32.mrf.mxu0
      %1640 = vmatprep.mubr.f32.mxu0 0.0
      %1641 = vmatmul.mubr.f32.gmra.mxu0 %v1505
      %v1642 = vpop.f32.mrf.mxu0
      %v1643 = vadd.f32 %v1534, %v1642
      %v1644 = vpop.f32.mrf.mxu0
      %1645 = vmatprep.mubr.f32.mxu0 0.0
      %1646 = vmatmul.mubr.f32.gmra.mxu0 %v1506
      %v1647 = vpop.f32.mrf.mxu0
      %v1648 = vadd.f32 %v1534, %v1647
      %v1649 = vpop.f32.mrf.mxu0
      %1650 = vmatprep.mubr.f32.mxu0 0.0
      %1651 = vmatmul.mubr.f32.gmra.mxu0 %v1507
      %v1652 = vpop.f32.mrf.mxu0
      %v1653 = vadd.f32 %v1534, %v1652
      %v1654 = vpop.f32.mrf.mxu0
      %1655 = vmatprep.mubr.f32.mxu0 0.0
      %1656 = vmatmul.mubr.f32.gmra.mxu0 %v1508
      %v1657 = vpop.f32.mrf.mxu0
      %v1658 = vadd.f32 %v1534, %v1657
      %v1659 = vpop.f32.mrf.mxu0
      %1660 = vmatprep.mubr.f32.mxu0 0.0
      %1661 = vmatmul.mubr.f32.gmra.mxu0 %v1509
      %v1662 = vpop.f32.mrf.mxu0
      %v1663 = vadd.f32 %v1534, %v1662
      %v1664 = vpop.f32.mrf.mxu0
      %1665 = vmatprep.mubr.f32.mxu0 0.0
      %1666 = vmatmul.mubr.f32.gmra.mxu0 %v1510
      %v1667 = vpop.f32.mrf.mxu0
      %v1668 = vadd.f32 %v1534, %v1667
      %v1669 = vpop.f32.mrf.mxu0
      %1670 = vmatprep.mubr.f32.mxu0 0.0
      %1671 = vmatmul.mubr.f32.gmra.mxu0 %v1511
      %v1672 = vpop.f32.mrf.mxu0
      %v1673 = vadd.f32 %v1534, %v1672
      %v1674 = vpop.f32.mrf.mxu0
      %1675 = vmatprep.mubr.f32.mxu0 0.0
      %1676 = vmatmul.mubr.f32.gmra.mxu0 %v1512
      %v1677 = vpop.f32.mrf.mxu0
      %v1678 = vadd.f32 %v1534, %v1677
      %v1679 = vpop.f32.mrf.mxu0
      %1680 = vdwg.mxu0
      %v1705 = vrot.slane %v283, 1
      %v1706 = vrot.slane %v284, 1
      %v1707 = vsel %vm692, %v1705, %v1706
      %v1708 = vrot.slane %v285, 1
      %v1709 = vsel %vm692, %v1706, %v1708
      %v1710 = vrot.slane %v286, 1
      %v1711 = vrot.slane %v287, 1
      %v1712 = vsel %vm692, %v1710, %v1711
      %v1713 = vrot.slane %v288, 1
      %v1714 = vsel %vm692, %v1711, %v1713
      %v1715 = vrot.slane %v289, 1
      %v1716 = vrot.slane %v290, 1
      %v1717 = vsel %vm692, %v1715, %v1716
      %v1718 = vrot.slane %v291, 1
      %v1719 = vsel %vm692, %v1716, %v1718
      %v1720 = vrot.slane %v292, 1
      %v1721 = vrot.slane %v293, 1
      %v1722 = vsel %vm692, %v1720, %v1721
      %v1723 = vrot.slane %v294, 1
      %v1724 = vsel %vm692, %v1721, %v1723
      %v1725 = vrot.slane %v295, 1
      %v1726 = vrot.slane %v296, 1
      %v1727 = vsel %vm692, %v1725, %v1726
      %v1728 = vrot.slane %v297, 1
      %v1729 = vsel %vm692, %v1726, %v1728
      %v1730 = vrot.slane %v298, 1
      %v1731 = vrot.slane %v299, 1
      %v1732 = vsel %vm692, %v1730, %v1731
      %v1733 = vrot.slane %v300, 1
      %v1734 = vsel %vm692, %v1731, %v1733
      %v1735 = vrot.slane %v301, 1
      %v1736 = vrot.slane %v302, 1
      %v1737 = vsel %vm692, %v1735, %v1736
      %v1738 = vrot.slane %v303, 1
      %v1739 = vsel %vm692, %v1736, %v1738
      %v1740 = vrot.slane %v304, 1
      %v1741 = vrot.slane %v305, 1
      %v1742 = vsel %vm692, %v1740, %v1741
      %v1743 = vrot.slane %v306, 1
      %v1744 = vsel %vm692, %v1741, %v1743
      %v1761 = vadd.f32 %v1603, %v1707
      %v1762 = vadd.f32 %v1608, %v1709
      %v1763 = vadd.f32 %v1613, %v1712
      %v1764 = vadd.f32 %v1618, %v1714
      %v1765 = vadd.f32 %v1623, %v1717
      %v1766 = vadd.f32 %v1628, %v1719
      %v1767 = vadd.f32 %v1633, %v1722
      %v1768 = vadd.f32 %v1638, %v1724
      %v1769 = vadd.f32 %v1643, %v1727
      %v1770 = vadd.f32 %v1648, %v1729
      %v1771 = vadd.f32 %v1653, %v1732
      %v1772 = vadd.f32 %v1658, %v1734
      %v1773 = vadd.f32 %v1663, %v1737
      %v1774 = vadd.f32 %v1668, %v1739
      %v1775 = vadd.f32 %v1673, %v1742
      %v1776 = vadd.f32 %v1678, %v1744
      %1777 = vst [vmem:[%s275] sm:$0xff] %v1761
      %1778 = vst [vmem:[%s275 + $0x8] sm:$0xff] %v1762
      %1779 = vst [vmem:[%s275 + $0x10] sm:$0xff] %v1763
      %1780 = vst [vmem:[%s275 + $0x18] sm:$0xff] %v1764
      %1781 = vst [vmem:[%s275 + $0x20] sm:$0xff] %v1765
      %1782 = vst [vmem:[%s275 + $0x28] sm:$0xff] %v1766
      %1783 = vst [vmem:[%s275 + $0x30] sm:$0xff] %v1767
      %1784 = vst [vmem:[%s275 + $0x38] sm:$0xff] %v1768
      %1785 = vst [vmem:[%s275 + $0x40] sm:$0xff] %v1769
      %1786 = vst [vmem:[%s275 + $0x48] sm:$0xff] %v1770
      %1787 = vst [vmem:[%s275 + $0x50] sm:$0xff] %v1771
      %1788 = vst [vmem:[%s275 + $0x58] sm:$0xff] %v1772
      %1789 = vst [vmem:[%s275 + $0x60] sm:$0xff] %v1773
      %1790 = vst [vmem:[%s275 + $0x68] sm:$0xff] %v1774
      %1791 = vst [vmem:[%s275 + $0x70] sm:$0xff] %v1775
      %1792 = vst [vmem:[%s275 + $0x78] sm:$0xff] %v1776
      %s1793 = smul.u32 8, %s22
      %p1794 = scmp.lt.s32.totalorder %s21, 1
      %s1795 = scalar_select %p1794, %s21, 1
      %p1796 = scmp.lt.s32.totalorder %s1793, 15
      %s1797 = scalar_select %p1796, %s1793, 15
      %s1798 = smul.addr %s1797, 2
      %s1799 = smul.addr %s1795, 32
      %s1800 = sadd.s32 %s1798, %s1799
      %s1801 = smul.addr %s1800, 8
      %s1802 = scalar_lea.vmem %s6, %s1801
      // Predicated region
      $region45: #{inverted_residual_forward.1} parent=43 // pred_check
        %p1803 = pneg %p180
      $region46: #{inverted_residual_forward.1} parent=43 // pred_check_branch
        %1805 = sbr.rel (%p1803) target = $region48
      $region47: #{inverted_residual_forward.1} parent=43 // pred_region
        %s1806 = smul.u32 8, %s22
      $region48: #{inverted_residual_forward.1} parent=43 // pred_fallthru
        _
    $region44: #{inverted_residual_forward.1} parent=5 // pred_fallthru
      _
    %p1807 = scmp.le.s32.totalorder 2, %s12
    // Predicated region
    $region49: #{inverted_residual_forward.1} parent=5 // pred_check
      %p1808 = pneg %p1807
    $region50: #{inverted_residual_forward.1} parent=5 // pred_check_branch
      %1810 = sbr.rel (%p1808) target = $region52
    $region51: #{inverted_residual_forward.1} parent=5 // pred_region
      %s1811 = ssub.s32 %s12, 2
      // Predicated region
      $region53: #{inverted_residual_forward.1} parent=51 // pred_check
        %p1812 = pneg %p186
      $region54: #{inverted_residual_forward.1} parent=51 // pred_check_branch
        %1814 = sbr.rel (%p1812) target = $region56
      $region55: #{inverted_residual_forward.1} parent=51 // pred_region
        %s1815 = smul.u32 8, %s24
        %p1816 = scmp.lt.s32.totalorder %s23, 1
        %s1817 = scalar_select %p1816, %s23, 1
        %p1818 = scmp.lt.s32.totalorder %s1815, 15
        %s1819 = scalar_select %p1818, %s1815, 15
        %s1820 = smul.addr %s1819, 2
        %s1821 = smul.addr %s1817, 32
        %s1822 = sadd.s32 %s1820, %s1821
        %s1823 = smul.addr %s1822, 8
        %s1824 = scalar_lea.vmem %s6, %s1823
      $region56: #{inverted_residual_forward.1} parent=51 // pred_fallthru
        _
    $region52: #{inverted_residual_forward.1} parent=5 // pred_fallthru
      _
  $region6: #{inverted_residual_forward.1} parent=0 // loop_footer
    %s16 = sadd.s32 1, %s12
  $region7: #{inverted_residual_forward.1} parent=0 // loop_footer_branch
    %11 = sbr.rel target = $region3
  $region8: #{inverted_residual_forward.1} parent=0 // loop_exit
    _

</llo_original>
